<compile_context>
chip_gen: v7x
topology: tpu7x:2x2x1
jax: 0.10.0
libtpu: 0.0.40
codegen_flags: <defaults>
</compile_context>

<pallas_src>
import functools

import jax
import jax.numpy as jnp
from jax.experimental import pallas as pl
from jax.experimental.pallas import tpu as pltpu


def conv_mgu_kernel(xpatch_ref, wx_ref, base_ref, wfh_ref,
                    gmm_ref, gamma_ref, beta_ref, h0_ref,
                    out_ref,
                    *, H, W, kh, kw, hid, n_groups, eps, bt):
    f32 = jnp.float32
    bf16 = jnp.bfloat16
    ph, pw = kh // 2, kw // 2
    HW = H * W
    KX = xpatch_ref.shape[-1]

    # ---- fused x-convs for the whole batch tile: ONE MXU matmul.
    #      Output lanes: candidate x-part in [0:hid], gate x-part in [hid:2*hid].
    pre_all = jnp.dot(xpatch_ref[...].reshape(bt * HW, KX), wx_ref[...],
                      preferred_element_type=f32)

    base = base_ref[...]      # candidate bias | hoisted gate h-conv + gate bias
    gamma = gamma_ref[...]    # (1, 128), valid in lanes [0:hid]
    beta = beta_ref[...]
    h0 = h0_ref[...]          # (1, hid)
    cnt = jnp.float32(HW * (hid // n_groups))

    # TODO(synk): replace with lax.fori_loop when bt > ~4.
    for bb in range(bt):
        pre = pre_all[bb * HW:(bb + 1) * HW] + base            # (HW, 128) f32

        # gate activation f (gate pre-activation lives in lanes [hid:2*hid])
        f = jax.nn.sigmoid(pre[:, hid:2 * hid])                # (HW, hid) f32
        f16 = f.astype(bf16)

        # ---- candidate h-conv: kh matmuls with K = kw*hid over a
        #      dx-lane-concatenated slab built entirely in registers
        #      (no scratch buffer, no halo re-zeroing). ----
        f_img = f16.reshape(H, W, hid)
        zc = jnp.zeros((H, pw, hid), bf16)
        fwide = jnp.concatenate([zc, f_img, zc], axis=1)       # (H, W+2pw, hid)
        fcols = jnp.concatenate(
            [fwide[:, dx:dx + W, :] for dx in range(kw)], axis=-1)  # (H, W, kw*hid)
        zr = jnp.zeros((ph, W, kw * hid), bf16)
        frows = jnp.concatenate([zr, fcols, zr], axis=0)       # (H+2ph, W, kw*hid)

        acc = pre                                  # candidate accumulates in lanes [0:hid]
        for dy in range(kh):
            acc = acc + jnp.dot(frows[dy:dy + H].reshape(HW, kw * hid),
                                wfh_ref[dy],
                                preferred_element_type=f32)

        # ---- GroupNorm on candidate lanes [0:hid]: reduce over rows FIRST
        #      (cheap cross-sublane sum), then one tiny (1,128)@(128,128)
        #      group-average matmul; two-pass (subtract-mean) variance. ----
        s1 = jnp.sum(acc, axis=0, keepdims=True)                        # (1, 128)
        mean_c = jnp.dot(s1, gmm_ref[...], preferred_element_type=f32) / cnt
        d = acc - mean_c
        s2 = jnp.sum(d * d, axis=0, keepdims=True)
        var_c = jnp.dot(s2, gmm_ref[...], preferred_element_type=f32) / cnt
        inv = jax.lax.rsqrt(var_c + eps)
        h_c = jnp.tanh(d * inv * gamma + beta)                          # (HW, 128)

        # ---- blend h_next = h0 + f*(h_c - h0); store exactly the hid valid
        #      channels (output last dim == hid, no padded lanes in HBM). ----
        out_ref[bb] = h0 + f * (h_c[:, :hid] - h0)


def conv_mgu_forward(x_nchw, h0, wg, bg, wc, bc, gamma, beta,
                     kernel_size, n_groups, eps=1e-5, bt=1):
    """x_nchw: (B, Cin, H, W); h0: (1, hid, 1, 1); wg/wc: (hid, Cin+hid, kh, kw)."""
    B, Cin, H, W = x_nchw.shape
    hid = h0.shape[1]
    kh, kw = kernel_size
    ph, pw = kh // 2, kw // 2
    HW = H * W

    NP = 128                                   # lane width for in-kernel slabs
    KX = kh * kw * Cin                         # im2col K (unpadded in HBM)
    assert 2 * hid <= NP and hid % n_groups == 0
    assert B % bt == 0

    f32, bf16 = jnp.float32, jnp.bfloat16

    # ---- wrapper-side layout plumbing (cheap XLA) ----
    # im2col patches of x: (B, H*W, kh*kw*Cin), bf16 (halves the dominant DMA).
    x = jnp.transpose(x_nchw, (0, 2, 3, 1)).astype(f32)        # NHWC
    x_pad = jnp.pad(x, ((0, 0), (ph, ph), (pw, pw), (0, 0)))
    taps = [x_pad[:, dy:dy + H, dx:dx + W, :]
            for dy in range(kh) for dx in range(kw)]
    xpatch = jnp.concatenate(taps, axis=-1).reshape(B, HW, KX).astype(bf16)

    # fused x-weights: candidate-x in cols [0:hid], gate-x in cols [hid:2*hid].
    wg_hwio = jnp.transpose(wg, (2, 3, 1, 0)).astype(f32)      # (kh,kw,Cin+hid,hid)
    wc_hwio = jnp.transpose(wc, (2, 3, 1, 0)).astype(f32)
    wgx = wg_hwio[:, :, :Cin, :].reshape(KX, hid)
    wcx = wc_hwio[:, :, :Cin, :].reshape(KX, hid)
    wx = (jnp.zeros((KX, NP), f32)
          .at[:, :hid].set(wcx)
          .at[:, hid:2 * hid].set(wgx)).astype(bf16)

    # hoisted batch-invariant gate h-conv (+ gate bias) and candidate bias (f32).
    h_vec = h0.reshape(hid).astype(f32)
    h_img = jnp.broadcast_to(h_vec.reshape(1, hid, 1, 1), (1, hid, H, W))
    gate_h = jax.lax.conv_general_dilated(
        h_img, wg[:, Cin:, :, :].astype(f32), (1, 1), ((ph, ph), (pw, pw)),
        dimension_numbers=('NCHW', 'OIHW', 'NCHW'))[0]          # (hid, H, W)
    gate_h = (jnp.transpose(gate_h, (1, 2, 0)).reshape(HW, hid)
              + bg.reshape(1, hid).astype(f32))
    base = jnp.zeros((HW, NP), f32)
    base = base.at[:, :hid].set(
        jnp.broadcast_to(bc.reshape(1, hid).astype(f32), (HW, hid)))
    base = base.at[:, hid:2 * hid].set(gate_h)

    # candidate h-weights with h0 folded in; output lanes [0:hid]; bf16.
    wch = wc_hwio[:, :, Cin:, :] * h_vec.reshape(1, 1, hid, 1)  # (kh,kw,hid,hid)
    wfh = (jnp.zeros((kh, kw * hid, NP), f32)
           .at[:, :, :hid].set(wch.reshape(kh, kw * hid, hid))).astype(bf16)

    # fused group-average one-hot matrix (channel -> same-group channels), f32.
    grp = jnp.arange(hid) // (hid // n_groups)
    gmm_small = (grp[:, None] == grp[None, :]).astype(f32)      # (hid, hid)
    gmm = jnp.zeros((NP, NP), f32).at[:hid, :hid].set(gmm_small)

    gamma_p = jnp.zeros((1, NP), f32).at[0, :hid].set(gamma.astype(f32))
    beta_p = jnp.zeros((1, NP), f32).at[0, :hid].set(beta.astype(f32))
    h0_p = h_vec.reshape(1, hid)

    kern = functools.partial(conv_mgu_kernel, H=H, W=W, kh=kh, kw=kw,
                             hid=hid, n_groups=n_groups, eps=eps, bt=bt)

    out = pl.pallas_call(
        kern,
        out_shape=jax.ShapeDtypeStruct((B, HW, hid), f32),
        grid_spec=pltpu.PrefetchScalarGridSpec(
            num_scalar_prefetch=0,
            grid=(B // bt,),
            in_specs=[
                pl.BlockSpec((bt, HW, KX), lambda b: (b, 0, 0)),    # x im2col (bf16, unpadded K)
                pl.BlockSpec((KX, NP), lambda b: (0, 0)),           # fused x-weights (bf16)
                pl.BlockSpec((HW, NP), lambda b: (0, 0)),           # hoisted base (f32)
                pl.BlockSpec((kh, kw * hid, NP), lambda b: (0, 0, 0)),  # folded f-weights (bf16)
                pl.BlockSpec((NP, NP), lambda b: (0, 0)),           # group-average matrix
                pl.BlockSpec((1, NP), lambda b: (0, 0)),            # gamma
                pl.BlockSpec((1, NP), lambda b: (0, 0)),            # beta
                pl.BlockSpec((1, hid), lambda b: (0, 0)),           # h0
            ],
            out_specs=pl.BlockSpec((bt, HW, hid), lambda b: (b, 0, 0)),
        ),
        compiler_params=pltpu.CompilerParams(
            # batch steps are independent -> shard across TCs on v7x;
            # explicit VMEM limit (v5e's scoped default is only 16 MiB).
            dimension_semantics=("parallel",),
            vmem_limit_bytes=32 * 1024 * 1024),
    )(xpatch, wx, base, wfh, gmm, gamma_p, beta_p, h0_p)

    # restore NCHW (no padded-lane slicing needed anymore).
    out = out.reshape(B, H, W, hid)
    return jnp.transpose(out, (0, 3, 1, 2))


def reference_forward(x_nchw, h0, wg, bg, wc, bc, gamma, beta,
                      kernel_size, n_groups, eps=1e-5):
    """Plain-JAX f32 reference matching the PyTorch module (NCHW)."""
    B, Cin, H, W = x_nchw.shape
    hid = h0.shape[1]
    kh, kw = kernel_size
    ph, pw = kh // 2, kw // 2
    dn = ('NCHW', 'OIHW', 'NCHW')

    def conv(x, w, b):
        y = jax.lax.conv_general_dilated(x, w, (1, 1), ((ph, ph), (pw, pw)),
                                         dimension_numbers=dn)
        return y + b.reshape(1, hid, 1, 1)

    h_cur = jnp.broadcast_to(h0, (B, hid, H, W))
    combined = jnp.concatenate([x_nchw, h_cur], axis=1)
    f = jax.nn.sigmoid(conv(combined, wg, bg))
    combined2 = jnp.concatenate([x_nchw, f * h_cur], axis=1)
    pre = conv(combined2, wc, bc)

    G = n_groups
    xg = pre.reshape(B, G, hid // G, H, W)
    mean = xg.mean(axis=(2, 3, 4), keepdims=True)
    var = ((xg - mean) ** 2).mean(axis=(2, 3, 4), keepdims=True)
    normed = (xg - mean) / jnp.sqrt(var + eps)
    normed = normed.reshape(B, hid, H, W) * gamma.reshape(1, hid, 1, 1) \
        + beta.reshape(1, hid, 1, 1)
    h_c = jnp.tanh(normed)
    return (1.0 - f) * h_cur + f * h_c


if __name__ == "__main__":
    # Small deterministic setup consistent with the module's __init__.
    B, Cin, H, W = 2, 4, 16, 16
    hid = 32
    kernel_size = (3, 3)
    n_groups = 4
    Ct = Cin + hid

    key = jax.random.PRNGKey(0)
    k_x, k_wg, k_wc, k_bc, k_h0 = jax.random.split(key, 5)

    x = jax.random.normal(k_x, (B, Cin, H, W), dtype=jnp.float32)

    # Deterministic synthetic parameters (PyTorch uses orthogonal init; any
    # deterministic init is fine for a synthetic kernel).
    wg = 0.1 * jax.random.normal(k_wg, (hid, Ct, *kernel_size), dtype=jnp.float32)
    wc = 0.1 * jax.random.normal(k_wc, (hid, Ct, *kernel_size), dtype=jnp.float32)
    bg = jnp.full((hid,), -2.0, dtype=jnp.float32)        # gate bias init to -2.0
    bc = 0.05 * jax.random.normal(k_bc, (hid,), dtype=jnp.float32)
    gamma = jnp.ones((hid,), dtype=jnp.float32)            # GroupNorm affine
    beta = jnp.zeros((hid,), dtype=jnp.float32)
    h0 = jax.random.normal(k_h0, (1, hid, 1, 1), dtype=jnp.float32)

    # bt=1 keeps grid length 2 for B=2 (both v7x TensorCores busy); raise bt
    # for larger batches to amortize per-step overhead / MXU weight pushes.
    out = conv_mgu_forward(x, h0, wg, bg, wc, bc, gamma, beta,
                           kernel_size, n_groups, bt=1)
    out = jax.block_until_ready(out)

    ref = reference_forward(x, h0, wg, bg, wc, bc, gamma, beta,
                            kernel_size, n_groups)
    ref = jax.block_until_ready(ref)

    err = float(jnp.max(jnp.abs(out - ref)))
    assert out.shape == (B, hid, H, W), out.shape
    # bf16 matmul operands (f32 accumulation / GroupNorm stats) -> looser tol.
    assert err < 5e-2, f"max abs diff too large: {err}"

    print("KERNEL_OK")
</pallas_src>

<mosaic_0001>
module attributes {stable_mosaic.version = 11 : i64} {
  func.func @conv_mgu_kernel(%arg0: i32, %arg1: memref<1x256x36xbf16, #tpu.memory_space<vmem>>, %arg2: memref<36x128xbf16, #tpu.memory_space<vmem>>, %arg3: memref<256x128xf32, #tpu.memory_space<vmem>>, %arg4: memref<3x96x128xbf16, #tpu.memory_space<vmem>>, %arg5: memref<128x128xf32, #tpu.memory_space<vmem>>, %arg6: memref<1x128xf32, #tpu.memory_space<vmem>>, %arg7: memref<1x128xf32, #tpu.memory_space<vmem>>, %arg8: memref<1x32xf32, #tpu.memory_space<vmem>>, %arg9: memref<1x256x32xf32, #tpu.memory_space<vmem>>) attributes {dimension_semantics = [#tpu.dimension_semantics<parallel>], iteration_bounds = array<i64: 2>, scalar_prefetch = 0 : i64, scratch_operands = 0 : i64, tpu.core_type = #tpu.core_type<tc>, window_params = [{transform_indices = @transform_0, window_bounds = array<i64: 1, 256, 36>}, {pipeline_mode = #tpu.pipeline_mode<synchronous>, transform_indices = @transform_1, window_bounds = array<i64: 36, 128>}, {pipeline_mode = #tpu.pipeline_mode<synchronous>, transform_indices = @transform_2, window_bounds = array<i64: 256, 128>}, {pipeline_mode = #tpu.pipeline_mode<synchronous>, transform_indices = @transform_3, window_bounds = array<i64: 3, 96, 128>}, {pipeline_mode = #tpu.pipeline_mode<synchronous>, transform_indices = @transform_4, window_bounds = array<i64: 128, 128>}, {pipeline_mode = #tpu.pipeline_mode<synchronous>, transform_indices = @transform_5, window_bounds = array<i64: 1, 128>}, {pipeline_mode = #tpu.pipeline_mode<synchronous>, transform_indices = @transform_6, window_bounds = array<i64: 1, 128>}, {pipeline_mode = #tpu.pipeline_mode<synchronous>, transform_indices = @transform_7, window_bounds = array<i64: 1, 32>}, {transform_indices = @transform_8, window_bounds = array<i64: 1, 256, 32>}]} {
    %c0 = arith.constant 0 : index
    %c0_0 = arith.constant 0 : index
    %c0_1 = arith.constant 0 : index
    %0 = vector.load %arg1[%c0, %c0_0, %c0_1] : memref<1x256x36xbf16, #tpu.memory_space<vmem>>, vector<1x256x36xbf16>
    %1 = vector.shape_cast %0 : vector<1x256x36xbf16> to vector<256x36xbf16>
    %c0_2 = arith.constant 0 : index
    %c0_3 = arith.constant 0 : index
    %2 = vector.load %arg2[%c0_2, %c0_3] : memref<36x128xbf16, #tpu.memory_space<vmem>>, vector<36x128xbf16>
    %cst = arith.constant dense<0.000000e+00> : vector<256x128xf32>
    %3 = tpu.matmul %1, %2, %cst {dimension_numbers = #tpu.dot_dimension_numbers<[1], [0], [0], [1], [0, 0, 1, 1], [], []>} : vector<256x36xbf16>, vector<36x128xbf16>, vector<256x128xf32> -> vector<256x128xf32>
    %c0_4 = arith.constant 0 : index
    %c0_5 = arith.constant 0 : index
    %4 = vector.load %arg3[%c0_4, %c0_5] : memref<256x128xf32, #tpu.memory_space<vmem>>, vector<256x128xf32>
    %c0_6 = arith.constant 0 : index
    %c0_7 = arith.constant 0 : index
    %5 = vector.load %arg6[%c0_6, %c0_7] : memref<1x128xf32, #tpu.memory_space<vmem>>, vector<1x128xf32>
    %c0_8 = arith.constant 0 : index
    %c0_9 = arith.constant 0 : index
    %6 = vector.load %arg7[%c0_8, %c0_9] : memref<1x128xf32, #tpu.memory_space<vmem>>, vector<1x128xf32>
    %c0_10 = arith.constant 0 : index
    %c0_11 = arith.constant 0 : index
    %7 = vector.load %arg8[%c0_10, %c0_11] : memref<1x32xf32, #tpu.memory_space<vmem>>, vector<1x32xf32>
    %8 = arith.addf %3, %4 : vector<256x128xf32>
    %9 = vector.extract_strided_slice %8 {offsets = [0, 32], sizes = [256, 32], strides = [1, 1]} : vector<256x128xf32> to vector<256x32xf32>
    %10 = arith.negf %9 : vector<256x32xf32>
    %11 = math.exp %10 : vector<256x32xf32>
    %cst_12 = arith.constant 1.000000e+00 : f32
    %12 = vector.broadcast %cst_12 : f32 to vector<256x32xf32>
    %13 = arith.addf %12, %11 : vector<256x32xf32>
    %14 = arith.divf %12, %13 : vector<256x32xf32>
    %15 = arith.truncf %14 : vector<256x32xf32> to vector<256x32xbf16>
    %16 = vector.shape_cast %15 : vector<256x32xbf16> to vector<16x16x32xbf16>
    %cst_13 = arith.constant 0.000000e+00 : bf16
    %17 = vector.broadcast %cst_13 : bf16 to vector<16x1x32xbf16>
    %18 = tpu.concatenate %17, %16, %17 in 1 : vector<16x1x32xbf16>, vector<16x16x32xbf16>, vector<16x1x32xbf16> -> vector<16x18x32xbf16>
    %19 = vector.extract_strided_slice %18 {offsets = [0, 0, 0], sizes = [16, 16, 32], strides = [1, 1, 1]} : vector<16x18x32xbf16> to vector<16x16x32xbf16>
    %20 = vector.extract_strided_slice %18 {offsets = [0, 1, 0], sizes = [16, 16, 32], strides = [1, 1, 1]} : vector<16x18x32xbf16> to vector<16x16x32xbf16>
    %21 = vector.extract_strided_slice %18 {offsets = [0, 2, 0], sizes = [16, 16, 32], strides = [1, 1, 1]} : vector<16x18x32xbf16> to vector<16x16x32xbf16>
    %22 = tpu.concatenate %19, %20, %21 in 2 : vector<16x16x32xbf16>, vector<16x16x32xbf16>, vector<16x16x32xbf16> -> vector<16x16x96xbf16>
    %cst_14 = arith.constant 0.000000e+00 : bf16
    %23 = vector.broadcast %cst_14 : bf16 to vector<1x16x96xbf16>
    %24 = tpu.concatenate %23, %22, %23 in 0 : vector<1x16x96xbf16>, vector<16x16x96xbf16>, vector<1x16x96xbf16> -> vector<18x16x96xbf16>
    %25 = vector.extract_strided_slice %24 {offsets = [0, 0, 0], sizes = [16, 16, 96], strides = [1, 1, 1]} : vector<18x16x96xbf16> to vector<16x16x96xbf16>
    %26 = vector.shape_cast %25 : vector<16x16x96xbf16> to vector<256x96xbf16>
    %c0_15 = arith.constant 0 : index
    %c0_16 = arith.constant 0 : index
    %c0_17 = arith.constant 0 : index
    %27 = vector.load %arg4[%c0_15, %c0_16, %c0_17] : memref<3x96x128xbf16, #tpu.memory_space<vmem>>, vector<1x96x128xbf16>
    %28 = vector.shape_cast %27 : vector<1x96x128xbf16> to vector<96x128xbf16>
    %cst_18 = arith.constant dense<0.000000e+00> : vector<256x128xf32>
    %29 = tpu.matmul %26, %28, %cst_18 {dimension_numbers = #tpu.dot_dimension_numbers<[1], [0], [0], [1], [0, 0, 1, 1], [], []>} : vector<256x96xbf16>, vector<96x128xbf16>, vector<256x128xf32> -> vector<256x128xf32>
    %30 = arith.addf %8, %29 : vector<256x128xf32>
    %31 = vector.extract_strided_slice %24 {offsets = [1, 0, 0], sizes = [16, 16, 96], strides = [1, 1, 1]} : vector<18x16x96xbf16> to vector<16x16x96xbf16>
    %32 = vector.shape_cast %31 : vector<16x16x96xbf16> to vector<256x96xbf16>
    %c1 = arith.constant 1 : index
    %c0_19 = arith.constant 0 : index
    %c0_20 = arith.constant 0 : index
    %33 = vector.load %arg4[%c1, %c0_19, %c0_20] : memref<3x96x128xbf16, #tpu.memory_space<vmem>>, vector<1x96x128xbf16>
    %34 = vector.shape_cast %33 : vector<1x96x128xbf16> to vector<96x128xbf16>
    %cst_21 = arith.constant dense<0.000000e+00> : vector<256x128xf32>
    %35 = tpu.matmul %32, %34, %cst_21 {dimension_numbers = #tpu.dot_dimension_numbers<[1], [0], [0], [1], [0, 0, 1, 1], [], []>} : vector<256x96xbf16>, vector<96x128xbf16>, vector<256x128xf32> -> vector<256x128xf32>
    %36 = arith.addf %30, %35 : vector<256x128xf32>
    %37 = vector.extract_strided_slice %24 {offsets = [2, 0, 0], sizes = [16, 16, 96], strides = [1, 1, 1]} : vector<18x16x96xbf16> to vector<16x16x96xbf16>
    %38 = vector.shape_cast %37 : vector<16x16x96xbf16> to vector<256x96xbf16>
    %c2 = arith.constant 2 : index
    %c0_22 = arith.constant 0 : index
    %c0_23 = arith.constant 0 : index
    %39 = vector.load %arg4[%c2, %c0_22, %c0_23] : memref<3x96x128xbf16, #tpu.memory_space<vmem>>, vector<1x96x128xbf16>
    %40 = vector.shape_cast %39 : vector<1x96x128xbf16> to vector<96x128xbf16>
    %cst_24 = arith.constant dense<0.000000e+00> : vector<256x128xf32>
    %41 = tpu.matmul %38, %40, %cst_24 {dimension_numbers = #tpu.dot_dimension_numbers<[1], [0], [0], [1], [0, 0, 1, 1], [], []>} : vector<256x96xbf16>, vector<96x128xbf16>, vector<256x128xf32> -> vector<256x128xf32>
    %42 = arith.addf %36, %41 : vector<256x128xf32>
    %cst_25 = arith.constant dense<0.000000e+00> : vector<128xf32>
    %43 = vector.multi_reduction <add>, %42, %cst_25 [0] : vector<256x128xf32> to vector<128xf32>
    %44 = vector.shape_cast %43 : vector<128xf32> to vector<1x128xf32>
    %c0_26 = arith.constant 0 : index
    %c0_27 = arith.constant 0 : index
    %45 = vector.load %arg5[%c0_26, %c0_27] : memref<128x128xf32, #tpu.memory_space<vmem>>, vector<128x128xf32>
    %cst_28 = arith.constant dense<0.000000e+00> : vector<1x128xf32>
    %46 = tpu.matmul %44, %45, %cst_28 {dimension_numbers = #tpu.dot_dimension_numbers<[1], [0], [0], [1], [0, 0, 1, 1], [], []>} : vector<1x128xf32>, vector<128x128xf32>, vector<1x128xf32> -> vector<1x128xf32>
    %cst_29 = arith.constant 2.048000e+03 : f32
    %47 = vector.broadcast %cst_29 : f32 to vector<1x128xf32>
    %48 = arith.divf %46, %47 : vector<1x128xf32>
    %49 = vector.broadcast %48 : vector<1x128xf32> to vector<256x128xf32>
    %50 = arith.subf %42, %49 : vector<256x128xf32>
    %51 = arith.mulf %50, %50 : vector<256x128xf32>
    %cst_30 = arith.constant dense<0.000000e+00> : vector<128xf32>
    %52 = vector.multi_reduction <add>, %51, %cst_30 [0] : vector<256x128xf32> to vector<128xf32>
    %53 = vector.shape_cast %52 : vector<128xf32> to vector<1x128xf32>
    %c0_31 = arith.constant 0 : index
    %c0_32 = arith.constant 0 : index
    %54 = vector.load %arg5[%c0_31, %c0_32] : memref<128x128xf32, #tpu.memory_space<vmem>>, vector<128x128xf32>
    %cst_33 = arith.constant dense<0.000000e+00> : vector<1x128xf32>
    %55 = tpu.matmul %53, %54, %cst_33 {dimension_numbers = #tpu.dot_dimension_numbers<[1], [0], [0], [1], [0, 0, 1, 1], [], []>} : vector<1x128xf32>, vector<128x128xf32>, vector<1x128xf32> -> vector<1x128xf32>
    %cst_34 = arith.constant 2.048000e+03 : f32
    %56 = vector.broadcast %cst_34 : f32 to vector<1x128xf32>
    %57 = arith.divf %55, %56 : vector<1x128xf32>
    %cst_35 = arith.constant 9.99999974E-6 : f32
    %58 = vector.broadcast %cst_35 : f32 to vector<1x128xf32>
    %59 = arith.addf %57, %58 : vector<1x128xf32>
    %60 = math.rsqrt %59 : vector<1x128xf32>
    %61 = vector.broadcast %60 : vector<1x128xf32> to vector<256x128xf32>
    %62 = arith.mulf %50, %61 : vector<256x128xf32>
    %63 = vector.broadcast %5 : vector<1x128xf32> to vector<256x128xf32>
    %64 = arith.mulf %62, %63 : vector<256x128xf32>
    %65 = vector.broadcast %6 : vector<1x128xf32> to vector<256x128xf32>
    %66 = arith.addf %64, %65 : vector<256x128xf32>
    %67 = math.tanh %66 : vector<256x128xf32>
    %68 = vector.extract_strided_slice %67 {offsets = [0, 0], sizes = [256, 32], strides = [1, 1]} : vector<256x128xf32> to vector<256x32xf32>
    %69 = vector.broadcast %7 : vector<1x32xf32> to vector<256x32xf32>
    %70 = arith.subf %68, %69 : vector<256x32xf32>
    %71 = arith.mulf %14, %70 : vector<256x32xf32>
    %72 = vector.broadcast %7 : vector<1x32xf32> to vector<256x32xf32>
    %73 = arith.addf %72, %71 : vector<256x32xf32>
    %c0_36 = arith.constant 0 : index
    %c0_37 = arith.constant 0 : index
    %c0_38 = arith.constant 0 : index
    %74 = vector.load %arg9[%c0_36, %c0_37, %c0_38] : memref<1x256x32xf32, #tpu.memory_space<vmem>>, vector<1x256x32xf32>
    %75 = vector.shape_cast %74 : vector<1x256x32xf32> to vector<256x32xf32>
    %76 = vector.shape_cast %73 : vector<256x32xf32> to vector<1x256x32xf32>
    tpu.vector_store %arg9[%c0_36, %c0_37, %c0_38], %76 {strides = array<i32>} : memref<1x256x32xf32, #tpu.memory_space<vmem>>, vector<1x256x32xf32>,
    return
  }
  func.func @transform_0(%arg0: i32) -> (i32, i32, i32) {
    %c0_i32 = arith.constant 0 : i32
    %c0_i32_0 = arith.constant 0 : i32
    %c0_i32_1 = arith.constant 0 : i32
    return %arg0, %c0_i32, %c0_i32_0 : i32, i32, i32
  }
  func.func @transform_1(%arg0: i32) -> (i32, i32) {
    %c0_i32 = arith.constant 0 : i32
    %c0_i32_0 = arith.constant 0 : i32
    %c0_i32_1 = arith.constant 0 : i32
    return %c0_i32, %c0_i32_0 : i32, i32
  }
  func.func @transform_2(%arg0: i32) -> (i32, i32) {
    %c0_i32 = arith.constant 0 : i32
    %c0_i32_0 = arith.constant 0 : i32
    %c0_i32_1 = arith.constant 0 : i32
    return %c0_i32, %c0_i32_0 : i32, i32
  }
  func.func @transform_3(%arg0: i32) -> (i32, i32, i32) {
    %c0_i32 = arith.constant 0 : i32
    %c0_i32_0 = arith.constant 0 : i32
    %c0_i32_1 = arith.constant 0 : i32
    %c0_i32_2 = arith.constant 0 : i32
    return %c0_i32, %c0_i32_0, %c0_i32_1 : i32, i32, i32
  }
  func.func @transform_4(%arg0: i32) -> (i32, i32) {
    %c0_i32 = arith.constant 0 : i32
    %c0_i32_0 = arith.constant 0 : i32
    %c0_i32_1 = arith.constant 0 : i32
    return %c0_i32, %c0_i32_0 : i32, i32
  }
  func.func @transform_5(%arg0: i32) -> (i32, i32) {
    %c0_i32 = arith.constant 0 : i32
    %c0_i32_0 = arith.constant 0 : i32
    %c0_i32_1 = arith.constant 0 : i32
    return %c0_i32, %c0_i32_0 : i32, i32
  }
  func.func @transform_6(%arg0: i32) -> (i32, i32) {
    %c0_i32 = arith.constant 0 : i32
    %c0_i32_0 = arith.constant 0 : i32
    %c0_i32_1 = arith.constant 0 : i32
    return %c0_i32, %c0_i32_0 : i32, i32
  }
  func.func @transform_7(%arg0: i32) -> (i32, i32) {
    %c0_i32 = arith.constant 0 : i32
    %c0_i32_0 = arith.constant 0 : i32
    %c0_i32_1 = arith.constant 0 : i32
    return %c0_i32, %c0_i32_0 : i32, i32
  }
  func.func @transform_8(%arg0: i32) -> (i32, i32, i32) {
    %c0_i32 = arith.constant 0 : i32
    %c0_i32_0 = arith.constant 0 : i32
    %c0_i32_1 = arith.constant 0 : i32
    return %arg0, %c0_i32, %c0_i32_0 : i32, i32, i32
  }
}

</mosaic_0001>

<llo_original>
// kernel: tpu_custom_call.1
$region0: #{tpu_custom_call.1}
  #allocation0 [shape = 'u32[]', space=smem, size = 0x4, offset = 0x4, fixed_abs, tag = 'smem constant byte address 0x4 - core index']
  #allocation1 [shape = 'u32[144,128]{1,0:T(1,128)}', space=vmem, size = 0x12000, scoped, tag = 'internal scratch']
  %s0 = inlined_call_operand.vmem [shape: bf16[2,256,36], index: 0, kind: input, shape index: {}]
  %s1 = inlined_call_operand.vmem [shape: bf16[36,128], index: 1, kind: input, shape index: {}]
  %s2 = inlined_call_operand.vmem [shape: f32[256,128], index: 2, kind: input, shape index: {}]
  %s3 = inlined_call_operand.hbm [shape: bf16[3,96,128], index: 3, kind: input, shape index: {}]
  %s4 = inlined_call_operand.hbm [shape: f32[128,128], index: 4, kind: input, shape index: {}]
  %s5 = inlined_call_operand.vmem [shape: f32[1,128], index: 5, kind: input, shape index: {}]
  %s6 = inlined_call_operand.vmem [shape: f32[1,128], index: 6, kind: input, shape index: {}]
  %s7 = inlined_call_operand.vmem [shape: f32[1,32], index: 7, kind: input, shape index: {}]
  %s8 = inlined_call_operand.vmem [shape: f32[2,256,32], index: 8, kind: output, shape index: {}]
  %s9 = sld [smem:[#allocation0]]
  $region73: #{tpu_custom_call.1} parent=0
    _
  %s11 = ssub.s32 1, %s9
  %s12 = scalar_select 0, %s11, %s9
  $region1: #{tpu_custom_call.1} parent=0
    #allocation2 [shape = 'u8[73728]{0}', space=vmem, size = 0x12000, scoped, tag = 'input window, operand 3, single buffered']
    #allocation3 [shape = 's32[2]{0}', space=sflag, size = 0x8, scoped, tag = 'scoped memory for tpu_custom_call.1']
    #allocation4 [shape = 'u8[65536]{0}', space=vmem, size = 0x10000, scoped, tag = 'input window, operand 4, single buffered']
    #allocation5 [shape = 's32[1]{0}', space=sflag, size = 0x4, scoped, tag = 'scoped memory for tpu_custom_call.1']
    %13 = vsyncpa [#allocation3], 0
    %14 = vsyncpa [#allocation5], 0
    loop: start=0, step=1, limit=4
    $region2: #{tpu_custom_call.1} parent=1 // loop_pre_header
      _
    $region3: #{tpu_custom_call.1} parent=1 // loop_header
      %s16 = sphi 0, %s20
      %p17 = scmp.ge.s32.totalorder %s16, 4
      %s26 = sphi 0, %s28
      %s29 = sphi 0, %s26
      %s30 = sphi 0, %s29
      %s46 = sphi 0, %s30
      %s50 = sphi 0, %s50
      %s52 = sphi 0, %s50
      %s53 = sphi 0, %s52
      %s67 = sphi 0, %s53
      %s71 = sphi 0, %s71
      %s73 = sphi 0, %s71
      %s74 = sphi 0, %s73
      %s88 = sphi 0, %s74
      %s92 = sphi 0, %s92
      %s94 = sphi 0, %s92
      %s95 = sphi 0, %s94
      %s109 = sphi 0, %s95
      %s113 = sphi 0, %s113
      %s115 = sphi 0, %s113
      %s116 = sphi 0, %s115
      %s130 = sphi 0, %s116
      %s134 = sphi 0, %s134
      %s136 = sphi 0, %s134
      %s137 = sphi 0, %s136
      %s151 = sphi 0, %s137
      %s155 = sphi 0, %s155
      %s157 = sphi 0, %s155
      %s158 = sphi 0, %s157
      %s172 = sphi 0, %s158
      %s176 = sphi 0, %s176
      %s178 = sphi 0, %s176
      %s179 = sphi 0, %s178
      %s193 = sphi 0, %s179
      %s199 = sphi 0, %s201
      %s202 = sphi 0, %s199
      %s203 = sphi 0, %s202
      %s219 = sphi 0, %s203
    $region4: #{tpu_custom_call.1} parent=1 // loop_header_branch
      %19 = sbr.rel (%p17) target = $region8
    $region5: #{tpu_custom_call.1} parent=1 // loop_body
      %s21 = ssub.s32 %s16, 1
      %s22 = ssub.s32 %s16, 2
      %s23 = sadd.s32 %s16, 1
      %s24 = ssub.s32 %s16, %s23
      %p25 = scmp.eq.s32.totalorder %s24, 0
      %s27 = sadd.s32 %s26, 1
      %s28 = scalar_select %p25, %s26, %s27
      %p31 = pneg %p25
      %p32 = scmp.eq.s32.totalorder %s16, 1
      %p33 = por %p31, %p32
      %p34 = scmp.ne.s32.totalorder %s26, %s29
      %p35 = scmp.eq.s32.totalorder %s16, 0
      %p36 = por %p34, %p35
      %p37 = scmp.ne.s32.totalorder %s26, %s29
      %p38 = scmp.eq.s32.totalorder %s21, 1
      %p39 = por %p37, %p38
      %p40 = scmp.ne.s32.totalorder %s29, %s30
      %p41 = scmp.eq.s32.totalorder %s21, 0
      %p42 = por %p40, %p41
      %p43 = scmp.ne.s32.totalorder %s29, %s30
      %p44 = scmp.eq.s32.totalorder %s22, 1
      %p45 = por %p43, %p44
      %p47 = scmp.ne.s32.totalorder %s30, %s46
      %p48 = scmp.eq.s32.totalorder %s22, 0
      %p49 = por %p47, %p48
      %s51 = sadd.s32 %s50, 1
      %p54 = scmp.eq.s32.totalorder %s16, 1
      %p55 = scmp.ne.s32.totalorder %s50, %s52
      %p56 = scmp.eq.s32.totalorder %s16, 0
      %p57 = por %p55, %p56
      %p58 = scmp.ne.s32.totalorder %s50, %s52
      %p59 = scmp.eq.s32.totalorder %s21, 1
      %p60 = por %p58, %p59
      %p61 = scmp.ne.s32.totalorder %s52, %s53
      %p62 = scmp.eq.s32.totalorder %s21, 0
      %p63 = por %p61, %p62
      %p64 = scmp.ne.s32.totalorder %s52, %s53
      %p65 = scmp.eq.s32.totalorder %s22, 1
      %p66 = por %p64, %p65
      %p68 = scmp.ne.s32.totalorder %s53, %s67
      %p69 = scmp.eq.s32.totalorder %s22, 0
      %p70 = por %p68, %p69
      %s72 = sadd.s32 %s71, 1
      %p75 = scmp.eq.s32.totalorder %s16, 1
      %p76 = scmp.ne.s32.totalorder %s71, %s73
      %p77 = scmp.eq.s32.totalorder %s16, 0
      %p78 = por %p76, %p77
      %p79 = scmp.ne.s32.totalorder %s71, %s73
      %p80 = scmp.eq.s32.totalorder %s21, 1
      %p81 = por %p79, %p80
      %p82 = scmp.ne.s32.totalorder %s73, %s74
      %p83 = scmp.eq.s32.totalorder %s21, 0
      %p84 = por %p82, %p83
      %p85 = scmp.ne.s32.totalorder %s73, %s74
      %p86 = scmp.eq.s32.totalorder %s22, 1
      %p87 = por %p85, %p86
      %p89 = scmp.ne.s32.totalorder %s74, %s88
      %p90 = scmp.eq.s32.totalorder %s22, 0
      %p91 = por %p89, %p90
      %s93 = sadd.s32 %s92, 1
      %p96 = scmp.eq.s32.totalorder %s16, 1
      %p97 = scmp.ne.s32.totalorder %s92, %s94
      %p98 = scmp.eq.s32.totalorder %s16, 0
      %p99 = por %p97, %p98
      %p100 = scmp.ne.s32.totalorder %s92, %s94
      %p101 = scmp.eq.s32.totalorder %s21, 1
      %p102 = por %p100, %p101
      %p103 = scmp.ne.s32.totalorder %s94, %s95
      %p104 = scmp.eq.s32.totalorder %s21, 0
      %p105 = por %p103, %p104
      %p106 = scmp.ne.s32.totalorder %s94, %s95
      %p107 = scmp.eq.s32.totalorder %s22, 1
      %p108 = por %p106, %p107
      %p110 = scmp.ne.s32.totalorder %s95, %s109
      %p111 = scmp.eq.s32.totalorder %s22, 0
      %p112 = por %p110, %p111
      %s114 = sadd.s32 %s113, 1
      %p117 = scmp.eq.s32.totalorder %s16, 1
      %p118 = scmp.ne.s32.totalorder %s113, %s115
      %p119 = scmp.eq.s32.totalorder %s16, 0
      %p120 = por %p118, %p119
      %p121 = scmp.ne.s32.totalorder %s113, %s115
      %p122 = scmp.eq.s32.totalorder %s21, 1
      %p123 = por %p121, %p122
      %p124 = scmp.ne.s32.totalorder %s115, %s116
      %p125 = scmp.eq.s32.totalorder %s21, 0
      %p126 = por %p124, %p125
      %p127 = scmp.ne.s32.totalorder %s115, %s116
      %p128 = scmp.eq.s32.totalorder %s22, 1
      %p129 = por %p127, %p128
      %p131 = scmp.ne.s32.totalorder %s116, %s130
      %p132 = scmp.eq.s32.totalorder %s22, 0
      %p133 = por %p131, %p132
      %s135 = sadd.s32 %s134, 1
      %p138 = scmp.eq.s32.totalorder %s16, 1
      %p139 = scmp.ne.s32.totalorder %s134, %s136
      %p140 = scmp.eq.s32.totalorder %s16, 0
      %p141 = por %p139, %p140
      %p142 = scmp.ne.s32.totalorder %s134, %s136
      %p143 = scmp.eq.s32.totalorder %s21, 1
      %p144 = por %p142, %p143
      %p145 = scmp.ne.s32.totalorder %s136, %s137
      %p146 = scmp.eq.s32.totalorder %s21, 0
      %p147 = por %p145, %p146
      %p148 = scmp.ne.s32.totalorder %s136, %s137
      %p149 = scmp.eq.s32.totalorder %s22, 1
      %p150 = por %p148, %p149
      %p152 = scmp.ne.s32.totalorder %s137, %s151
      %p153 = scmp.eq.s32.totalorder %s22, 0
      %p154 = por %p152, %p153
      %s156 = sadd.s32 %s155, 1
      %p159 = scmp.eq.s32.totalorder %s16, 1
      %p160 = scmp.ne.s32.totalorder %s155, %s157
      %p161 = scmp.eq.s32.totalorder %s16, 0
      %p162 = por %p160, %p161
      %p163 = scmp.ne.s32.totalorder %s155, %s157
      %p164 = scmp.eq.s32.totalorder %s21, 1
      %p165 = por %p163, %p164
      %p166 = scmp.ne.s32.totalorder %s157, %s158
      %p167 = scmp.eq.s32.totalorder %s21, 0
      %p168 = por %p166, %p167
      %p169 = scmp.ne.s32.totalorder %s157, %s158
      %p170 = scmp.eq.s32.totalorder %s22, 1
      %p171 = por %p169, %p170
      %p173 = scmp.ne.s32.totalorder %s158, %s172
      %p174 = scmp.eq.s32.totalorder %s22, 0
      %p175 = por %p173, %p174
      %s177 = sadd.s32 %s176, 1
      %p180 = scmp.eq.s32.totalorder %s16, 1
      %p181 = scmp.ne.s32.totalorder %s176, %s178
      %p182 = scmp.eq.s32.totalorder %s16, 0
      %p183 = por %p181, %p182
      %p184 = scmp.ne.s32.totalorder %s176, %s178
      %p185 = scmp.eq.s32.totalorder %s21, 1
      %p186 = por %p184, %p185
      %p187 = scmp.ne.s32.totalorder %s178, %s179
      %p188 = scmp.eq.s32.totalorder %s21, 0
      %p189 = por %p187, %p188
      %p190 = scmp.ne.s32.totalorder %s178, %s179
      %p191 = scmp.eq.s32.totalorder %s22, 1
      %p192 = por %p190, %p191
      %p194 = scmp.ne.s32.totalorder %s179, %s193
      %p195 = scmp.eq.s32.totalorder %s22, 0
      %p196 = por %p194, %p195
      %s197 = ssub.s32 %s16, %s23
      %p198 = scmp.eq.s32.totalorder %s197, 0
      %s200 = sadd.s32 %s199, 1
      %s201 = scalar_select %p198, %s199, %s200
      %p204 = pneg %p198
      %p205 = scmp.eq.s32.totalorder %s16, 1
      %p206 = por %p204, %p205
      %p207 = scmp.ne.s32.totalorder %s199, %s202
      %p208 = scmp.eq.s32.totalorder %s16, 0
      %p209 = por %p207, %p208
      %p210 = scmp.ne.s32.totalorder %s199, %s202
      %p211 = scmp.eq.s32.totalorder %s21, 1
      %p212 = por %p210, %p211
      %p213 = scmp.ne.s32.totalorder %s202, %s203
      %p214 = scmp.eq.s32.totalorder %s21, 0
      %p215 = por %p213, %p214
      %p216 = scmp.ne.s32.totalorder %s202, %s203
      %p217 = scmp.eq.s32.totalorder %s22, 1
      %p218 = por %p216, %p217
      %p220 = scmp.ne.s32.totalorder %s203, %s219
      %p221 = scmp.eq.s32.totalorder %s22, 0
      %p222 = por %p220, %p221
      %p223 = scmp.le.s32.totalorder 1, %s16
      %p224 = scmp.lt.s32.totalorder %s16, 3
      %p225 = pnand %p223, %p224
      %p226 = pneg %p225
      // Predicated region
      $region9: #{tpu_custom_call.1} parent=5 // pred_check
        _
      $region10: #{tpu_custom_call.1} parent=5 // pred_check_branch
        %228 = sbr.rel (%p225) target = $region12
      $region11: #{tpu_custom_call.1} parent=5 // pred_region
        %s229 = ssub.s32 %s16, 1
        // Predicated region
        $region13: #{tpu_custom_call.1} parent=11 // pred_check
          %p230 = pneg %p63
        $region14: #{tpu_custom_call.1} parent=11 // pred_check_branch
          %232 = sbr.rel (%p230) target = $region16
        $region15: #{tpu_custom_call.1} parent=11 // pred_region
          _
        $region16: #{tpu_custom_call.1} parent=11 // pred_fallthru
          _
        // Predicated region
        $region17: #{tpu_custom_call.1} parent=11 // pred_check
          %p233 = pneg %p84
        $region18: #{tpu_custom_call.1} parent=11 // pred_check_branch
          %235 = sbr.rel (%p233) target = $region20
        $region19: #{tpu_custom_call.1} parent=11 // pred_region
          _
        $region20: #{tpu_custom_call.1} parent=11 // pred_fallthru
          _
        // Predicated region
        $region21: #{tpu_custom_call.1} parent=11 // pred_check
          %p236 = pneg %p105
        $region22: #{tpu_custom_call.1} parent=11 // pred_check_branch
          %238 = sbr.rel (%p236) target = $region24
        $region23: #{tpu_custom_call.1} parent=11 // pred_region
          %s240 = ssub.s32 2304, 2304
          %241 = vsyncadd [#allocation3], %s240
          %s242 = sshll.u32 [#allocation2], 4
          %s243 = int_to_ptr.vmem [resolvable:$true] %s242
          %248 = dma.hbm_to_vmem [thread:$0]  %s3, 2304, %s243, [#allocation3], 64, 64, 4
        $region24: #{tpu_custom_call.1} parent=11 // pred_fallthru
          _
        // Predicated region
        $region25: #{tpu_custom_call.1} parent=11 // pred_check
          %p249 = pneg %p126
        $region26: #{tpu_custom_call.1} parent=11 // pred_check_branch
          %251 = sbr.rel (%p249) target = $region28
        $region27: #{tpu_custom_call.1} parent=11 // pred_region
          %s253 = ssub.s32 2048, 2048
          %254 = vsyncadd [#allocation5], %s253
          %s255 = sshll.u32 [#allocation4], 4
          %s256 = int_to_ptr.vmem [resolvable:$true] %s255
          %261 = dma.hbm_to_vmem [thread:$0]  %s4, 2048, %s256, [#allocation5], 128, 128, 8
        $region28: #{tpu_custom_call.1} parent=11 // pred_fallthru
          _
        // Predicated region
        $region29: #{tpu_custom_call.1} parent=11 // pred_check
          %p262 = pneg %p147
        $region30: #{tpu_custom_call.1} parent=11 // pred_check_branch
          %264 = sbr.rel (%p262) target = $region32
        $region31: #{tpu_custom_call.1} parent=11 // pred_region
          _
        $region32: #{tpu_custom_call.1} parent=11 // pred_fallthru
          _
        // Predicated region
        $region33: #{tpu_custom_call.1} parent=11 // pred_check
          %p265 = pneg %p168
        $region34: #{tpu_custom_call.1} parent=11 // pred_check_branch
          %267 = sbr.rel (%p265) target = $region36
        $region35: #{tpu_custom_call.1} parent=11 // pred_region
          _
        $region36: #{tpu_custom_call.1} parent=11 // pred_fallthru
          _
        // Predicated region
        $region37: #{tpu_custom_call.1} parent=11 // pred_check
          %p268 = pneg %p189
        $region38: #{tpu_custom_call.1} parent=11 // pred_check_branch
          %270 = sbr.rel (%p268) target = $region40
        $region39: #{tpu_custom_call.1} parent=11 // pred_region
          _
        $region40: #{tpu_custom_call.1} parent=11 // pred_fallthru
          _
      $region12: #{tpu_custom_call.1} parent=5 // pred_fallthru
        _
      %p271 = scmp.lt.s32.totalorder %s16, 2
      // Predicated region
      $region41: #{tpu_custom_call.1} parent=5 // pred_check
        %p272 = pneg %p271
      $region42: #{tpu_custom_call.1} parent=5 // pred_check_branch
        %274 = sbr.rel (%p272) target = $region44
      $region43: #{tpu_custom_call.1} parent=5 // pred_region
        // Predicated region
        $region45: #{tpu_custom_call.1} parent=43 // pred_check
          %p275 = pneg %p36
        $region46: #{tpu_custom_call.1} parent=43 // pred_check_branch
          %277 = sbr.rel (%p275) target = $region48
        $region47: #{tpu_custom_call.1} parent=43 // pred_region
          %p278 = scmp.lt.s32.totalorder %s16, 1
          %s279 = scalar_select %p278, %s16, 1
          %s280 = smul.addr %s279, 32
          %s281 = smul.addr %s280, 4
          %s282 = scalar_lea.vmem %s0, %s281
        $region48: #{tpu_custom_call.1} parent=43 // pred_fallthru
          _
      $region44: #{tpu_custom_call.1} parent=5 // pred_fallthru
        _
      %p283 = scmp.le.s32.totalorder 1, %s16
      %p284 = scmp.lt.s32.totalorder %s16, 3
      %p285 = pnand %p283, %p284
      %p286 = pneg %p285
      // Predicated region
      $region49: #{tpu_custom_call.1} parent=5 // pred_check
        _
      $region50: #{tpu_custom_call.1} parent=5 // pred_check_branch
        %288 = sbr.rel (%p285) target = $region52
      $region51: #{tpu_custom_call.1} parent=5 // pred_region
        %s289 = ssub.s32 %s16, 1
        // Predicated region
        $region53: #{tpu_custom_call.1} parent=51 // pred_check
          %p290 = pneg %p105
        $region54: #{tpu_custom_call.1} parent=51 // pred_check_branch
          %292 = sbr.rel (%p290) target = $region56
        $region55: #{tpu_custom_call.1} parent=51 // pred_region
          %293 = dma.done [#allocation3], 2304
        $region56: #{tpu_custom_call.1} parent=51 // pred_fallthru
          _
        // Predicated region
        $region57: #{tpu_custom_call.1} parent=51 // pred_check
          %p294 = pneg %p126
        $region58: #{tpu_custom_call.1} parent=51 // pred_check_branch
          %296 = sbr.rel (%p294) target = $region60
        $region59: #{tpu_custom_call.1} parent=51 // pred_region
          %297 = dma.done [#allocation5], 2048
        $region60: #{tpu_custom_call.1} parent=51 // pred_fallthru
          _
        %p298 = scmp.lt.s32.totalorder %s21, 1
        %s299 = scalar_select %p298, %s21, 1
        %s300 = smul.addr %s299, 32
        %s301 = smul.addr %s300, 4
        %s302 = scalar_lea.vmem %s0, %s301
        %p303 = pneg %p42
        %p304 = pneg %p39
        %p305 = pneg %p63
        %p306 = pneg %p60
        %p307 = pneg %p84
        %p308 = pneg %p81
        %p309 = pneg %p105
        %p310 = pneg %p102
        %p311 = pneg %p126
        %p312 = pneg %p123
        %p313 = pneg %p147
        %p314 = pneg %p144
        %p315 = pneg %p168
        %p316 = pneg %p165
        %p317 = pneg %p189
        %p318 = pneg %p186
        %p319 = pneg %p215
        %p320 = pneg %p212
        %p321 = scmp.lt.s32.totalorder %s21, 1
        %s322 = scalar_select %p321, %s21, 1
        %s323 = smul.addr %s322, 32
        %s324 = smul.addr %s323, 8
        %s325 = scalar_lea.vmem %s8, %s324
        %p326 = scmp.lt.s32.totalorder %s21, 1
        %s327 = scalar_select %p326, %s21, 1
        %s328 = smul.addr %s327, 32
        %s329 = smul.addr %s328, 4
        %s330 = scalar_lea.vmem %s0, %s329
        %p331 = scmp.lt.s32.totalorder %s21, 1
        %s332 = scalar_select %p331, %s21, 1
        %s333 = smul.addr %s332, 32
        %s334 = smul.addr %s333, 8
        %s335 = scalar_lea.vmem %s8, %s334
        %v337 = vld [vmem:[%s330] sm:$0xf]
        %v338 = vld [vmem:[%s330 + $0x4] sm:$0xf]
        %v339 = vld [vmem:[%s330 + $0x8] sm:$0xf]
        %v340 = vld [vmem:[%s330 + $0xc] sm:$0xf]
        %v341 = vld [vmem:[%s330 + $0x10] sm:$0xf]
        %v342 = vld [vmem:[%s330 + $0x14] sm:$0xf]
        %v343 = vld [vmem:[%s330 + $0x18] sm:$0xf]
        %v344 = vld [vmem:[%s330 + $0x1c] sm:$0xf]
        %v345 = vld [vmem:[%s330 + $0x20] sm:$0xf]
        %v346 = vld [vmem:[%s330 + $0x24] sm:$0xf]
        %v347 = vld [vmem:[%s330 + $0x28] sm:$0xf]
        %v348 = vld [vmem:[%s330 + $0x2c] sm:$0xf]
        %v349 = vld [vmem:[%s330 + $0x30] sm:$0xf]
        %v350 = vld [vmem:[%s330 + $0x34] sm:$0xf]
        %v351 = vld [vmem:[%s330 + $0x38] sm:$0xf]
        %v352 = vld [vmem:[%s330 + $0x3c] sm:$0xf]
        %v353 = vld [vmem:[%s330 + $0x40] sm:$0xf]
        %v354 = vld [vmem:[%s330 + $0x44] sm:$0xf]
        %v355 = vld [vmem:[%s330 + $0x48] sm:$0xf]
        %v356 = vld [vmem:[%s330 + $0x4c] sm:$0xf]
        %v357 = vld [vmem:[%s330 + $0x50] sm:$0xf]
        %v358 = vld [vmem:[%s330 + $0x54] sm:$0xf]
        %v359 = vld [vmem:[%s330 + $0x58] sm:$0xf]
        %v360 = vld [vmem:[%s330 + $0x5c] sm:$0xf]
        %v361 = vld [vmem:[%s330 + $0x60] sm:$0xf]
        %v362 = vld [vmem:[%s330 + $0x64] sm:$0xf]
        %v363 = vld [vmem:[%s330 + $0x68] sm:$0xf]
        %v364 = vld [vmem:[%s330 + $0x6c] sm:$0xf]
        %v365 = vld [vmem:[%s330 + $0x70] sm:$0xf]
        %v366 = vld [vmem:[%s330 + $0x74] sm:$0xf]
        %v367 = vld [vmem:[%s330 + $0x78] sm:$0xf]
        %v368 = vld [vmem:[%s330 + $0x7c] sm:$0xf]
        %v369 = vld [vmem:[%s1] sm:$0xf]
        %v370 = vld [vmem:[%s1 + $0x4] sm:$0xf]
        %v371 = vld [vmem:[%s1 + $0x8] sm:$0xf]
        %v372 = vld [vmem:[%s1 + $0xc] sm:$0xf]
        %v373 = vld [vmem:[%s1 + $0x10] sm:$0x3]
        %v374 = vld [vmem:[%s2] sm:$0xff]
        %v375 = vld [vmem:[%s2 + $0x8] sm:$0xff]
        %v376 = vld [vmem:[%s2 + $0x10] sm:$0xff]
        %v377 = vld [vmem:[%s2 + $0x18] sm:$0xff]
        %v378 = vld [vmem:[%s2 + $0x20] sm:$0xff]
        %v379 = vld [vmem:[%s2 + $0x28] sm:$0xff]
        %v380 = vld [vmem:[%s2 + $0x30] sm:$0xff]
        %v381 = vld [vmem:[%s2 + $0x38] sm:$0xff]
        %v382 = vld [vmem:[%s2 + $0x40] sm:$0xff]
        %v383 = vld [vmem:[%s2 + $0x48] sm:$0xff]
        %v384 = vld [vmem:[%s2 + $0x50] sm:$0xff]
        %v385 = vld [vmem:[%s2 + $0x58] sm:$0xff]
        %v386 = vld [vmem:[%s2 + $0x60] sm:$0xff]
        %v387 = vld [vmem:[%s2 + $0x68] sm:$0xff]
        %v388 = vld [vmem:[%s2 + $0x70] sm:$0xff]
        %v389 = vld [vmem:[%s2 + $0x78] sm:$0xff]
        %v390 = vld [vmem:[%s2 + $0x80] sm:$0xff]
        %v391 = vld [vmem:[%s2 + $0x88] sm:$0xff]
        %v392 = vld [vmem:[%s2 + $0x90] sm:$0xff]
        %v393 = vld [vmem:[%s2 + $0x98] sm:$0xff]
        %v394 = vld [vmem:[%s2 + $0xa0] sm:$0xff]
        %v395 = vld [vmem:[%s2 + $0xa8] sm:$0xff]
        %v396 = vld [vmem:[%s2 + $0xb0] sm:$0xff]
        %v397 = vld [vmem:[%s2 + $0xb8] sm:$0xff]
        %v398 = vld [vmem:[%s2 + $0xc0] sm:$0xff]
        %v399 = vld [vmem:[%s2 + $0xc8] sm:$0xff]
        %v400 = vld [vmem:[%s2 + $0xd0] sm:$0xff]
        %v401 = vld [vmem:[%s2 + $0xd8] sm:$0xff]
        %v402 = vld [vmem:[%s2 + $0xe0] sm:$0xff]
        %v403 = vld [vmem:[%s2 + $0xe8] sm:$0xff]
        %v404 = vld [vmem:[%s2 + $0xf0] sm:$0xff]
        %v405 = vld [vmem:[%s2 + $0xf8] sm:$0xff]
        %v406 = vld [vmem:[%s5] sm:$0x1]
        %v407 = vld [vmem:[%s6] sm:$0x1]
        %v408 = vld [vmem:[%s7] sm:$0x1]
        %v441 = vunpack.c.l.b16 %v337
        %v442 = vunpack.c.l.b16 %v338
        %v443 = vunpack.c.l.b16 %v339
        %v444 = vunpack.c.l.b16 %v340
        %v445 = vunpack.c.l.b16 %v341
        %v446 = vunpack.c.l.b16 %v342
        %v447 = vunpack.c.l.b16 %v343
        %v448 = vunpack.c.l.b16 %v344
        %v449 = vunpack.c.l.b16 %v345
        %v450 = vunpack.c.l.b16 %v346
        %v451 = vunpack.c.l.b16 %v347
        %v452 = vunpack.c.l.b16 %v348
        %v453 = vunpack.c.l.b16 %v349
        %v454 = vunpack.c.l.b16 %v350
        %v455 = vunpack.c.l.b16 %v351
        %v456 = vunpack.c.l.b16 %v352
        %v457 = vunpack.c.l.b16 %v353
        %v458 = vunpack.c.l.b16 %v354
        %v459 = vunpack.c.l.b16 %v355
        %v460 = vunpack.c.l.b16 %v356
        %v461 = vunpack.c.l.b16 %v357
        %v462 = vunpack.c.l.b16 %v358
        %v463 = vunpack.c.l.b16 %v359
        %v464 = vunpack.c.l.b16 %v360
        %v465 = vunpack.c.l.b16 %v361
        %v466 = vunpack.c.l.b16 %v362
        %v467 = vunpack.c.l.b16 %v363
        %v468 = vunpack.c.l.b16 %v364
        %v469 = vunpack.c.l.b16 %v365
        %v470 = vunpack.c.l.b16 %v366
        %v471 = vunpack.c.l.b16 %v367
        %v472 = vunpack.c.l.b16 %v368
        %v473 = vpack.c.b16 %v442, %v441
        %v474 = vpack.c.b16 %v444, %v443
        %v475 = vpack.c.b16 %v446, %v445
        %v476 = vpack.c.b16 %v448, %v447
        %v477 = vpack.c.b16 %v450, %v449
        %v478 = vpack.c.b16 %v452, %v451
        %v479 = vpack.c.b16 %v454, %v453
        %v480 = vpack.c.b16 %v456, %v455
        %v481 = vpack.c.b16 %v458, %v457
        %v482 = vpack.c.b16 %v460, %v459
        %v483 = vpack.c.b16 %v462, %v461
        %v484 = vpack.c.b16 %v464, %v463
        %v485 = vpack.c.b16 %v466, %v465
        %v486 = vpack.c.b16 %v468, %v467
        %v487 = vpack.c.b16 %v470, %v469
        %v488 = vpack.c.b16 %v472, %v471
        %v494 = vunpack.c.l.b16 %v369
        %v495 = vunpack.c.l.b16 %v370
        %v496 = vunpack.c.l.b16 %v371
        %v497 = vunpack.c.l.b16 %v372
        %v498 = vunpack.c.l.b16 %v373
        %v499 = vpack.c.b16 %v495, %v494
        %v500 = vpack.c.b16 %v497, %v496
        %v501 = vpack.c.b16 %v498, %v498
        %vm504 = vcmask 293888
        %v506 = vsel %vm504, %v473, 0
        %v509 = vsel %vm504, %v474, 0
        %v512 = vsel %vm504, %v475, 0
        %v515 = vsel %vm504, %v476, 0
        %v518 = vsel %vm504, %v477, 0
        %v521 = vsel %vm504, %v478, 0
        %v524 = vsel %vm504, %v479, 0
        %v527 = vsel %vm504, %v480, 0
        %v530 = vsel %vm504, %v481, 0
        %v533 = vsel %vm504, %v482, 0
        %v536 = vsel %vm504, %v483, 0
        %v539 = vsel %vm504, %v484, 0
        %v542 = vsel %vm504, %v485, 0
        %v545 = vsel %vm504, %v486, 0
        %v548 = vsel %vm504, %v487, 0
        %v551 = vsel %vm504, %v488, 0
        %vm553 = vcmask 1041408
        %v555 = vsel %vm553, %v501, 0
        %557 = vmatprep.subr.bf16.mxu0 0
        %558 = vmatpush1.bf16.msra.mxu0 %v499
        %559 = vmatprep.subr.bf16.mxu0 0
        %560 = vmatpush1.bf16.msra.mxu0 %v500
        %561 = vmatprep.subr.bf16.mxu0 0
        %562 = vmatpush1.bf16.msra.mxu0 %v555
        %563 = vmatprep.subr.bf16.mxu0 0
        %564 = vmatpush1.bf16.msra.mxu0 0
        %565 = vmatprep.subr.bf16.mxu0 0
        %566 = vmatpush1.bf16.msra.mxu0 0
        %567 = vmatprep.subr.bf16.mxu0 0
        %568 = vmatpush1.bf16.msra.mxu0 0
        %569 = vmatprep.subr.bf16.mxu0 0
        %570 = vmatpush1.bf16.msra.mxu0 0
        %571 = vmatprep.subr.bf16.mxu0 0
        %572 = vmatpush1.bf16.msra.mxu0 0
        %573 = vmatprep.subr.bf16.mxu0 0
        %574 = vmatpush1.bf16.msra.mxu0 0
        %575 = vmatprep.subr.bf16.mxu0 0
        %576 = vmatpush1.bf16.msra.mxu0 0
        %577 = vmatprep.subr.bf16.mxu0 0
        %578 = vmatpush1.bf16.msra.mxu0 0
        %579 = vmatprep.subr.bf16.mxu0 0
        %580 = vmatpush1.bf16.msra.mxu0 0
        %581 = vmatprep.subr.bf16.mxu0 0
        %582 = vmatpush1.bf16.msra.mxu0 0
        %583 = vmatprep.subr.bf16.mxu0 0
        %584 = vmatpush1.bf16.msra.mxu0 0
        %585 = vmatprep.subr.bf16.mxu0 0
        %586 = vmatpush1.bf16.msra.mxu0 0
        %587 = vmatprep.subr.bf16.mxu0 0
        %588 = vmatpush1.bf16.msra.mxu0 0
        %589 = vmatprep.mubr.bf16.mxu0 0
        %590 = vmatmul.mubr.bf16.gmra.mrb[0].mxu0 %v506
        %v591 = vpop.f32.mrb[0].mxu0
        %v592 = vadd.f32 %v374, %v591
        %v593 = vpop.f32.mrb[0].mxu0
        %v594 = vpop.f32.mrb[0].mxu0
        %v595 = vadd.f32 %v375, %v594
        %v596 = vpop.f32.mrb[0].mxu0
        %597 = vmatprep.mubr.bf16.mxu0 0
        %598 = vmatmul.mubr.bf16.gmra.mrb[0].mxu0 %v509
        %v599 = vpop.f32.mrb[0].mxu0
        %v600 = vadd.f32 %v376, %v599
        %v601 = vpop.f32.mrb[0].mxu0
        %v602 = vpop.f32.mrb[0].mxu0
        %v603 = vadd.f32 %v377, %v602
        %v604 = vpop.f32.mrb[0].mxu0
        %605 = vmatprep.mubr.bf16.mxu0 0
        %606 = vmatmul.mubr.bf16.gmra.mrb[0].mxu0 %v512
        %v607 = vpop.f32.mrb[0].mxu0
        %v608 = vadd.f32 %v378, %v607
        %v609 = vpop.f32.mrb[0].mxu0
        %v610 = vpop.f32.mrb[0].mxu0
        %v611 = vadd.f32 %v379, %v610
        %v612 = vpop.f32.mrb[0].mxu0
        %613 = vmatprep.mubr.bf16.mxu0 0
        %614 = vmatmul.mubr.bf16.gmra.mrb[0].mxu0 %v515
        %v615 = vpop.f32.mrb[0].mxu0
        %v616 = vadd.f32 %v380, %v615
        %v617 = vpop.f32.mrb[0].mxu0
        %v618 = vpop.f32.mrb[0].mxu0
        %v619 = vadd.f32 %v381, %v618
        %v620 = vpop.f32.mrb[0].mxu0
        %621 = vmatprep.mubr.bf16.mxu0 0
        %622 = vmatmul.mubr.bf16.gmra.mrb[0].mxu0 %v518
        %v623 = vpop.f32.mrb[0].mxu0
        %v624 = vadd.f32 %v382, %v623
        %v625 = vpop.f32.mrb[0].mxu0
        %v626 = vpop.f32.mrb[0].mxu0
        %v627 = vadd.f32 %v383, %v626
        %v628 = vpop.f32.mrb[0].mxu0
        %629 = vmatprep.mubr.bf16.mxu0 0
        %630 = vmatmul.mubr.bf16.gmra.mrb[0].mxu0 %v521
        %v631 = vpop.f32.mrb[0].mxu0
        %v632 = vadd.f32 %v384, %v631
        %v633 = vpop.f32.mrb[0].mxu0
        %v634 = vpop.f32.mrb[0].mxu0
        %v635 = vadd.f32 %v385, %v634
        %v636 = vpop.f32.mrb[0].mxu0
        %637 = vmatprep.mubr.bf16.mxu0 0
        %638 = vmatmul.mubr.bf16.gmra.mrb[0].mxu0 %v524
        %v639 = vpop.f32.mrb[0].mxu0
        %v640 = vadd.f32 %v386, %v639
        %v641 = vpop.f32.mrb[0].mxu0
        %v642 = vpop.f32.mrb[0].mxu0
        %v643 = vadd.f32 %v387, %v642
        %v644 = vpop.f32.mrb[0].mxu0
        %645 = vmatprep.mubr.bf16.mxu0 0
        %646 = vmatmul.mubr.bf16.gmra.mrb[0].mxu0 %v527
        %v647 = vpop.f32.mrb[0].mxu0
        %v648 = vadd.f32 %v388, %v647
        %v649 = vpop.f32.mrb[0].mxu0
        %v650 = vpop.f32.mrb[0].mxu0
        %v651 = vadd.f32 %v389, %v650
        %v652 = vpop.f32.mrb[0].mxu0
        %653 = vmatprep.mubr.bf16.mxu0 0
        %654 = vmatmul.mubr.bf16.gmra.mrb[0].mxu0 %v530
        %v655 = vpop.f32.mrb[0].mxu0
        %v656 = vadd.f32 %v390, %v655
        %v657 = vpop.f32.mrb[0].mxu0
        %v658 = vpop.f32.mrb[0].mxu0
        %v659 = vadd.f32 %v391, %v658
        %v660 = vpop.f32.mrb[0].mxu0
        %661 = vmatprep.mubr.bf16.mxu0 0
        %662 = vmatmul.mubr.bf16.gmra.mrb[0].mxu0 %v533
        %v663 = vpop.f32.mrb[0].mxu0
        %v664 = vadd.f32 %v392, %v663
        %v665 = vpop.f32.mrb[0].mxu0
        %v666 = vpop.f32.mrb[0].mxu0
        %v667 = vadd.f32 %v393, %v666
        %v668 = vpop.f32.mrb[0].mxu0
        %669 = vmatprep.mubr.bf16.mxu0 0
        %670 = vmatmul.mubr.bf16.gmra.mrb[0].mxu0 %v536
        %v671 = vpop.f32.mrb[0].mxu0
        %v672 = vadd.f32 %v394, %v671
        %v673 = vpop.f32.mrb[0].mxu0
        %v674 = vpop.f32.mrb[0].mxu0
        %v675 = vadd.f32 %v395, %v674
        %v676 = vpop.f32.mrb[0].mxu0
        %677 = vmatprep.mubr.bf16.mxu0 0
        %678 = vmatmul.mubr.bf16.gmra.mrb[0].mxu0 %v539
        %v679 = vpop.f32.mrb[0].mxu0
        %v680 = vadd.f32 %v396, %v679
        %v681 = vpop.f32.mrb[0].mxu0
        %v682 = vpop.f32.mrb[0].mxu0
        %v683 = vadd.f32 %v397, %v682
        %v684 = vpop.f32.mrb[0].mxu0
        %685 = vmatprep.mubr.bf16.mxu0 0
        %686 = vmatmul.mubr.bf16.gmra.mrb[0].mxu0 %v542
        %v687 = vpop.f32.mrb[0].mxu0
        %v688 = vadd.f32 %v398, %v687
        %v689 = vpop.f32.mrb[0].mxu0
        %v690 = vpop.f32.mrb[0].mxu0
        %v691 = vadd.f32 %v399, %v690
        %v692 = vpop.f32.mrb[0].mxu0
        %693 = vmatprep.mubr.bf16.mxu0 0
        %694 = vmatmul.mubr.bf16.gmra.mrb[0].mxu0 %v545
        %v695 = vpop.f32.mrb[0].mxu0
        %v696 = vadd.f32 %v400, %v695
        %v697 = vpop.f32.mrb[0].mxu0
        %v698 = vpop.f32.mrb[0].mxu0
        %v699 = vadd.f32 %v401, %v698
        %v700 = vpop.f32.mrb[0].mxu0
        %701 = vmatprep.mubr.bf16.mxu0 0
        %702 = vmatmul.mubr.bf16.gmra.mrb[0].mxu0 %v548
        %v703 = vpop.f32.mrb[0].mxu0
        %v704 = vadd.f32 %v402, %v703
        %v705 = vpop.f32.mrb[0].mxu0
        %v706 = vpop.f32.mrb[0].mxu0
        %v707 = vadd.f32 %v403, %v706
        %v708 = vpop.f32.mrb[0].mxu0
        %709 = vmatprep.mubr.bf16.mxu0 0
        %710 = vmatmul.mubr.bf16.gmra.mrb[0].mxu0 %v551
        %v711 = vpop.f32.mrb[0].mxu0
        %v712 = vadd.f32 %v404, %v711
        %v713 = vpop.f32.mrb[0].mxu0
        %v714 = vpop.f32.mrb[0].mxu0
        %v715 = vadd.f32 %v405, %v714
        %v716 = vpop.f32.mrb[0].mxu0
        %717 = vdwg.mxu0
        %v718 = vxor.u32 %v592, 2147483648
        %v719 = vxor.u32 %v595, 2147483648
        %v720 = vxor.u32 %v600, 2147483648
        %v721 = vxor.u32 %v603, 2147483648
        %v722 = vxor.u32 %v608, 2147483648
        %v723 = vxor.u32 %v611, 2147483648
        %v724 = vxor.u32 %v616, 2147483648
        %v725 = vxor.u32 %v619, 2147483648
        %v726 = vxor.u32 %v624, 2147483648
        %v727 = vxor.u32 %v627, 2147483648
        %v728 = vxor.u32 %v632, 2147483648
        %v729 = vxor.u32 %v635, 2147483648
        %v730 = vxor.u32 %v640, 2147483648
        %v731 = vxor.u32 %v643, 2147483648
        %v732 = vxor.u32 %v648, 2147483648
        %v733 = vxor.u32 %v651, 2147483648
        %v734 = vxor.u32 %v656, 2147483648
        %v735 = vxor.u32 %v659, 2147483648
        %v736 = vxor.u32 %v664, 2147483648
        %v737 = vxor.u32 %v667, 2147483648
        %v738 = vxor.u32 %v672, 2147483648
        %v739 = vxor.u32 %v675, 2147483648
        %v740 = vxor.u32 %v680, 2147483648
        %v741 = vxor.u32 %v683, 2147483648
        %v742 = vxor.u32 %v688, 2147483648
        %v743 = vxor.u32 %v691, 2147483648
        %v744 = vxor.u32 %v696, 2147483648
        %v745 = vxor.u32 %v699, 2147483648
        %v746 = vxor.u32 %v704, 2147483648
        %v747 = vxor.u32 %v707, 2147483648
        %v748 = vxor.u32 %v712, 2147483648
        %v749 = vxor.u32 %v715, 2147483648
        %v750 = vmul.f32 %v718, 1.442695
        %v751 = vpow.pop %v750
        %v752 = vmul.f32 %v719, 1.442695
        %v753 = vpow.pop %v752
        %v754 = vmul.f32 %v720, 1.442695
        %v755 = vpow.pop %v754
        %v756 = vmul.f32 %v721, 1.442695
        %v757 = vpow.pop %v756
        %v758 = vmul.f32 %v722, 1.442695
        %v759 = vpow.pop %v758
        %v760 = vmul.f32 %v723, 1.442695
        %v761 = vpow.pop %v760
        %v762 = vmul.f32 %v724, 1.442695
        %v763 = vpow.pop %v762
        %v764 = vmul.f32 %v725, 1.442695
        %v765 = vpow.pop %v764
        %v766 = vmul.f32 %v726, 1.442695
        %v767 = vpow.pop %v766
        %v768 = vmul.f32 %v727, 1.442695
        %v769 = vpow.pop %v768
        %v770 = vmul.f32 %v728, 1.442695
        %v771 = vpow.pop %v770
        %v772 = vmul.f32 %v729, 1.442695
        %v773 = vpow.pop %v772
        %v774 = vmul.f32 %v730, 1.442695
        %v775 = vpow.pop %v774
        %v776 = vmul.f32 %v731, 1.442695
        %v777 = vpow.pop %v776
        %v778 = vmul.f32 %v732, 1.442695
        %v779 = vpow.pop %v778
        %v780 = vmul.f32 %v733, 1.442695
        %v781 = vpow.pop %v780
        %v782 = vmul.f32 %v734, 1.442695
        %v783 = vpow.pop %v782
        %v784 = vmul.f32 %v735, 1.442695
        %v785 = vpow.pop %v784
        %v786 = vmul.f32 %v736, 1.442695
        %v787 = vpow.pop %v786
        %v788 = vmul.f32 %v737, 1.442695
        %v789 = vpow.pop %v788
        %v790 = vmul.f32 %v738, 1.442695
        %v791 = vpow.pop %v790
        %v792 = vmul.f32 %v739, 1.442695
        %v793 = vpow.pop %v792
        %v794 = vmul.f32 %v740, 1.442695
        %v795 = vpow.pop %v794
        %v796 = vmul.f32 %v741, 1.442695
        %v797 = vpow.pop %v796
        %v798 = vmul.f32 %v742, 1.442695
        %v799 = vpow.pop %v798
        %v800 = vmul.f32 %v743, 1.442695
        %v801 = vpow.pop %v800
        %v802 = vmul.f32 %v744, 1.442695
        %v803 = vpow.pop %v802
        %v804 = vmul.f32 %v745, 1.442695
        %v805 = vpow.pop %v804
        %v806 = vmul.f32 %v746, 1.442695
        %v807 = vpow.pop %v806
        %v808 = vmul.f32 %v747, 1.442695
        %v809 = vpow.pop %v808
        %v810 = vmul.f32 %v748, 1.442695
        %v811 = vpow.pop %v810
        %v812 = vmul.f32 %v749, 1.442695
        %v813 = vpow.pop %v812
        %v814 = vadd.f32 %v751, 1.0
        %v815 = vadd.f32 %v753, 1.0
        %v816 = vadd.f32 %v755, 1.0
        %v817 = vadd.f32 %v757, 1.0
        %v818 = vadd.f32 %v759, 1.0
        %v819 = vadd.f32 %v761, 1.0
        %v820 = vadd.f32 %v763, 1.0
        %v821 = vadd.f32 %v765, 1.0
        %v822 = vadd.f32 %v767, 1.0
        %v823 = vadd.f32 %v769, 1.0
        %v824 = vadd.f32 %v771, 1.0
        %v825 = vadd.f32 %v773, 1.0
        %v826 = vadd.f32 %v775, 1.0
        %v827 = vadd.f32 %v777, 1.0
        %v828 = vadd.f32 %v779, 1.0
        %v829 = vadd.f32 %v781, 1.0
        %v830 = vadd.f32 %v783, 1.0
        %v831 = vadd.f32 %v785, 1.0
        %v832 = vadd.f32 %v787, 1.0
        %v833 = vadd.f32 %v789, 1.0
        %v834 = vadd.f32 %v791, 1.0
        %v835 = vadd.f32 %v793, 1.0
        %v836 = vadd.f32 %v795, 1.0
        %v837 = vadd.f32 %v797, 1.0
        %v838 = vadd.f32 %v799, 1.0
        %v839 = vadd.f32 %v801, 1.0
        %v840 = vadd.f32 %v803, 1.0
        %v841 = vadd.f32 %v805, 1.0
        %v842 = vadd.f32 %v807, 1.0
        %v843 = vadd.f32 %v809, 1.0
        %v844 = vadd.f32 %v811, 1.0
        %v845 = vadd.f32 %v813, 1.0
        %v846 = vrcp.pop %v814
        %v847 = vmul.f32 1.0, %v846
        %v848 = vrcp.pop %v815
        %v849 = vmul.f32 1.0, %v848
        %v850 = vrcp.pop %v816
        %v851 = vmul.f32 1.0, %v850
        %v852 = vrcp.pop %v817
        %v853 = vmul.f32 1.0, %v852
        %v854 = vrcp.pop %v818
        %v855 = vmul.f32 1.0, %v854
        %v856 = vrcp.pop %v819
        %v857 = vmul.f32 1.0, %v856
        %v858 = vrcp.pop %v820
        %v859 = vmul.f32 1.0, %v858
        %v860 = vrcp.pop %v821
        %v861 = vmul.f32 1.0, %v860
        %v862 = vrcp.pop %v822
        %v863 = vmul.f32 1.0, %v862
        %v864 = vrcp.pop %v823
        %v865 = vmul.f32 1.0, %v864
        %v866 = vrcp.pop %v824
        %v867 = vmul.f32 1.0, %v866
        %v868 = vrcp.pop %v825
        %v869 = vmul.f32 1.0, %v868
        %v870 = vrcp.pop %v826
        %v871 = vmul.f32 1.0, %v870
        %v872 = vrcp.pop %v827
        %v873 = vmul.f32 1.0, %v872
        %v874 = vrcp.pop %v828
        %v875 = vmul.f32 1.0, %v874
        %v876 = vrcp.pop %v829
        %v877 = vmul.f32 1.0, %v876
        %v878 = vrcp.pop %v830
        %v879 = vmul.f32 1.0, %v878
        %v880 = vrcp.pop %v831
        %v881 = vmul.f32 1.0, %v880
        %v882 = vrcp.pop %v832
        %v883 = vmul.f32 1.0, %v882
        %v884 = vrcp.pop %v833
        %v885 = vmul.f32 1.0, %v884
        %v886 = vrcp.pop %v834
        %v887 = vmul.f32 1.0, %v886
        %v888 = vrcp.pop %v835
        %v889 = vmul.f32 1.0, %v888
        %v890 = vrcp.pop %v836
        %v891 = vmul.f32 1.0, %v890
        %v892 = vrcp.pop %v837
        %v893 = vmul.f32 1.0, %v892
        %v894 = vrcp.pop %v838
        %v895 = vmul.f32 1.0, %v894
        %v896 = vrcp.pop %v839
        %v897 = vmul.f32 1.0, %v896
        %v898 = vrcp.pop %v840
        %v899 = vmul.f32 1.0, %v898
        %v900 = vrcp.pop %v841
        %v901 = vmul.f32 1.0, %v900
        %v902 = vrcp.pop %v842
        %v903 = vmul.f32 1.0, %v902
        %v904 = vrcp.pop %v843
        %v905 = vmul.f32 1.0, %v904
        %v906 = vrcp.pop %v844
        %v907 = vmul.f32 1.0, %v906
        %v908 = vrcp.pop %v845
        %v909 = vmul.f32 1.0, %v908
        %v910 = vpack.c.bf16 %v849, %v847
        %v911 = vpack.c.bf16 %v853, %v851
        %v912 = vpack.c.bf16 %v857, %v855
        %v913 = vpack.c.bf16 %v861, %v859
        %v914 = vpack.c.bf16 %v865, %v863
        %v915 = vpack.c.bf16 %v869, %v867
        %v916 = vpack.c.bf16 %v873, %v871
        %v917 = vpack.c.bf16 %v877, %v875
        %v918 = vpack.c.bf16 %v881, %v879
        %v919 = vpack.c.bf16 %v885, %v883
        %v920 = vpack.c.bf16 %v889, %v887
        %v921 = vpack.c.bf16 %v893, %v891
        %v922 = vpack.c.bf16 %v897, %v895
        %v923 = vpack.c.bf16 %v901, %v899
        %v924 = vpack.c.bf16 %v905, %v903
        %v925 = vpack.c.bf16 %v909, %v907
        %v927 = vshrl.u32 %v910, 16
        %v929 = vrot.slane %v927, 7
        %v930 = vshll.u32 %v910, 16
        %v932 = vor.u32 %v929, %v930
        %v934 = vshrl.u32 %v911, 16
        %v936 = vrot.slane %v934, 7
        %v937 = vshll.u32 %v911, 16
        %v939 = vor.u32 %v936, %v937
        %v941 = vshrl.u32 %v912, 16
        %v943 = vrot.slane %v941, 7
        %v944 = vshll.u32 %v912, 16
        %v946 = vor.u32 %v943, %v944
        %v948 = vshrl.u32 %v913, 16
        %v950 = vrot.slane %v948, 7
        %v951 = vshll.u32 %v913, 16
        %v953 = vor.u32 %v950, %v951
        %v955 = vshrl.u32 %v914, 16
        %v957 = vrot.slane %v955, 7
        %v958 = vshll.u32 %v914, 16
        %v960 = vor.u32 %v957, %v958
        %v962 = vshrl.u32 %v915, 16
        %v964 = vrot.slane %v962, 7
        %v965 = vshll.u32 %v915, 16
        %v967 = vor.u32 %v964, %v965
        %v969 = vshrl.u32 %v916, 16
        %v971 = vrot.slane %v969, 7
        %v972 = vshll.u32 %v916, 16
        %v974 = vor.u32 %v971, %v972
        %v976 = vshrl.u32 %v917, 16
        %v978 = vrot.slane %v976, 7
        %v979 = vshll.u32 %v917, 16
        %v981 = vor.u32 %v978, %v979
        %v983 = vshrl.u32 %v918, 16
        %v985 = vrot.slane %v983, 7
        %v986 = vshll.u32 %v918, 16
        %v988 = vor.u32 %v985, %v986
        %v990 = vshrl.u32 %v919, 16
        %v992 = vrot.slane %v990, 7
        %v993 = vshll.u32 %v919, 16
        %v995 = vor.u32 %v992, %v993
        %v997 = vshrl.u32 %v920, 16
        %v999 = vrot.slane %v997, 7
        %v1000 = vshll.u32 %v920, 16
        %v1002 = vor.u32 %v999, %v1000
        %v1004 = vshrl.u32 %v921, 16
        %v1006 = vrot.slane %v1004, 7
        %v1007 = vshll.u32 %v921, 16
        %v1009 = vor.u32 %v1006, %v1007
        %v1011 = vshrl.u32 %v922, 16
        %v1013 = vrot.slane %v1011, 7
        %v1014 = vshll.u32 %v922, 16
        %v1016 = vor.u32 %v1013, %v1014
        %v1018 = vshrl.u32 %v923, 16
        %v1020 = vrot.slane %v1018, 7
        %v1021 = vshll.u32 %v923, 16
        %v1023 = vor.u32 %v1020, %v1021
        %v1025 = vshrl.u32 %v924, 16
        %v1027 = vrot.slane %v1025, 7
        %v1028 = vshll.u32 %v924, 16
        %v1030 = vor.u32 %v1027, %v1028
        %v1032 = vshrl.u32 %v925, 16
        %v1034 = vrot.slane %v1032, 7
        %v1035 = vshll.u32 %v925, 16
        %v1037 = vor.u32 %v1034, %v1035
        %1038 = vrot.lane.b32.xlu0 %v932, 96
        %v1039 = vpop.permute.xlu0 %1038
        %1040 = vrot.lane.b32.xlu0 %v929, 96
        %v1041 = vpop.permute.xlu0 %1040
        %1042 = vrot.lane.b32.xlu0 %v939, 96
        %v1043 = vpop.permute.xlu0 %1042
        %1044 = vrot.lane.b32.xlu0 %v936, 96
        %v1045 = vpop.permute.xlu0 %1044
        %1046 = vrot.lane.b32.xlu0 %v946, 96
        %v1047 = vpop.permute.xlu0 %1046
        %1048 = vrot.lane.b32.xlu0 %v943, 96
        %v1049 = vpop.permute.xlu0 %1048
        %1050 = vrot.lane.b32.xlu0 %v953, 96
        %v1051 = vpop.permute.xlu0 %1050
        %1052 = vrot.lane.b32.xlu0 %v950, 96
        %v1053 = vpop.permute.xlu0 %1052
        %1054 = vrot.lane.b32.xlu0 %v960, 96
        %v1055 = vpop.permute.xlu0 %1054
        %1056 = vrot.lane.b32.xlu0 %v957, 96
        %v1057 = vpop.permute.xlu0 %1056
        %1058 = vrot.lane.b32.xlu0 %v967, 96
        %v1059 = vpop.permute.xlu0 %1058
        %1060 = vrot.lane.b32.xlu0 %v964, 96
        %v1061 = vpop.permute.xlu0 %1060
        %1062 = vrot.lane.b32.xlu0 %v974, 96
        %v1063 = vpop.permute.xlu0 %1062
        %1064 = vrot.lane.b32.xlu0 %v971, 96
        %v1065 = vpop.permute.xlu0 %1064
        %1066 = vrot.lane.b32.xlu0 %v981, 96
        %v1067 = vpop.permute.xlu0 %1066
        %1068 = vrot.lane.b32.xlu0 %v978, 96
        %v1069 = vpop.permute.xlu0 %1068
        %1070 = vrot.lane.b32.xlu0 %v988, 96
        %v1071 = vpop.permute.xlu0 %1070
        %1072 = vrot.lane.b32.xlu0 %v985, 96
        %v1073 = vpop.permute.xlu0 %1072
        %1074 = vrot.lane.b32.xlu0 %v995, 96
        %v1075 = vpop.permute.xlu0 %1074
        %1076 = vrot.lane.b32.xlu0 %v992, 96
        %v1077 = vpop.permute.xlu0 %1076
        %1078 = vrot.lane.b32.xlu0 %v1002, 96
        %v1079 = vpop.permute.xlu0 %1078
        %1080 = vrot.lane.b32.xlu0 %v999, 96
        %v1081 = vpop.permute.xlu0 %1080
        %1082 = vrot.lane.b32.xlu0 %v1009, 96
        %v1083 = vpop.permute.xlu0 %1082
        %1084 = vrot.lane.b32.xlu0 %v1006, 96
        %v1085 = vpop.permute.xlu0 %1084
        %1086 = vrot.lane.b32.xlu0 %v1016, 96
        %v1087 = vpop.permute.xlu0 %1086
        %1088 = vrot.lane.b32.xlu0 %v1013, 96
        %v1089 = vpop.permute.xlu0 %1088
        %1090 = vrot.lane.b32.xlu0 %v1023, 96
        %v1091 = vpop.permute.xlu0 %1090
        %1092 = vrot.lane.b32.xlu0 %v1020, 96
        %v1093 = vpop.permute.xlu0 %1092
        %1094 = vrot.lane.b32.xlu0 %v1030, 96
        %v1095 = vpop.permute.xlu0 %1094
        %1096 = vrot.lane.b32.xlu0 %v1027, 96
        %v1097 = vpop.permute.xlu0 %1096
        %1098 = vrot.lane.b32.xlu0 %v1037, 96
        %v1099 = vpop.permute.xlu0 %1098
        %1100 = vrot.lane.b32.xlu0 %v1034, 96
        %v1101 = vpop.permute.xlu0 %1100
        %vm1134 = vcmask 1040384
        %vm1135 = vsmask.f32 256
        %vm1136 = vmand %vm1134, %vm1135
        %v1137 = vsel %vm1136, 0, %v1039
        %v1138 = vsel %vm1136, 0, %v1043
        %v1139 = vsel %vm1136, 0, %v1047
        %v1140 = vsel %vm1136, 0, %v1051
        %v1141 = vsel %vm1136, 0, %v1055
        %v1142 = vsel %vm1136, 0, %v1059
        %v1143 = vsel %vm1136, 0, %v1063
        %v1144 = vsel %vm1136, 0, %v1067
        %v1145 = vsel %vm1136, 0, %v1071
        %v1146 = vsel %vm1136, 0, %v1075
        %v1147 = vsel %vm1136, 0, %v1079
        %v1148 = vsel %vm1136, 0, %v1083
        %v1149 = vsel %vm1136, 0, %v1087
        %v1150 = vsel %vm1136, 0, %v1091
        %v1151 = vsel %vm1136, 0, %v1095
        %v1152 = vsel %vm1136, 0, %v1099
        %v1153 = vsel %vm1136, %v1041, 0
        %v1154 = vsel %vm1136, %v1045, 0
        %v1155 = vsel %vm1136, %v1049, 0
        %v1156 = vsel %vm1136, %v1053, 0
        %v1157 = vsel %vm1136, %v1057, 0
        %v1158 = vsel %vm1136, %v1061, 0
        %v1159 = vsel %vm1136, %v1065, 0
        %v1160 = vsel %vm1136, %v1069, 0
        %v1161 = vsel %vm1136, %v1073, 0
        %v1162 = vsel %vm1136, %v1077, 0
        %v1163 = vsel %vm1136, %v1081, 0
        %v1164 = vsel %vm1136, %v1085, 0
        %v1165 = vsel %vm1136, %v1089, 0
        %v1166 = vsel %vm1136, %v1093, 0
        %v1167 = vsel %vm1136, %v1097, 0
        %v1168 = vsel %vm1136, %v1101, 0
        %vm1169 = vsmask.f32 7424
        %v1171 = vshrl.u32 %v1137, 16
        %v1173 = vshll.u32 %v1137, 16
        %v1175 = vrot.slane %v1173, 1
        %v1176 = vor.u32 %v1171, %v1175
        %v1178 = vshll.u32 %v1153, 16
        %v1180 = vrot.slane %v1178, 1
        %v1181 = vsel %vm1169, %v1176, %v1180
        %v1183 = vshrl.u32 %v1138, 16
        %v1185 = vshll.u32 %v1138, 16
        %v1187 = vrot.slane %v1185, 1
        %v1188 = vor.u32 %v1183, %v1187
        %v1190 = vshll.u32 %v1154, 16
        %v1192 = vrot.slane %v1190, 1
        %v1193 = vsel %vm1169, %v1188, %v1192
        %v1195 = vshrl.u32 %v1139, 16
        %v1197 = vshll.u32 %v1139, 16
        %v1199 = vrot.slane %v1197, 1
        %v1200 = vor.u32 %v1195, %v1199
        %v1202 = vshll.u32 %v1155, 16
        %v1204 = vrot.slane %v1202, 1
        %v1205 = vsel %vm1169, %v1200, %v1204
        %v1207 = vshrl.u32 %v1140, 16
        %v1209 = vshll.u32 %v1140, 16
        %v1211 = vrot.slane %v1209, 1
        %v1212 = vor.u32 %v1207, %v1211
        %v1214 = vshll.u32 %v1156, 16
        %v1216 = vrot.slane %v1214, 1
        %v1217 = vsel %vm1169, %v1212, %v1216
        %v1219 = vshrl.u32 %v1141, 16
        %v1221 = vshll.u32 %v1141, 16
        %v1223 = vrot.slane %v1221, 1
        %v1224 = vor.u32 %v1219, %v1223
        %v1226 = vshll.u32 %v1157, 16
        %v1228 = vrot.slane %v1226, 1
        %v1229 = vsel %vm1169, %v1224, %v1228
        %v1231 = vshrl.u32 %v1142, 16
        %v1233 = vshll.u32 %v1142, 16
        %v1235 = vrot.slane %v1233, 1
        %v1236 = vor.u32 %v1231, %v1235
        %v1238 = vshll.u32 %v1158, 16
        %v1240 = vrot.slane %v1238, 1
        %v1241 = vsel %vm1169, %v1236, %v1240
        %v1243 = vshrl.u32 %v1143, 16
        %v1245 = vshll.u32 %v1143, 16
        %v1247 = vrot.slane %v1245, 1
        %v1248 = vor.u32 %v1243, %v1247
        %v1250 = vshll.u32 %v1159, 16
        %v1252 = vrot.slane %v1250, 1
        %v1253 = vsel %vm1169, %v1248, %v1252
        %v1255 = vshrl.u32 %v1144, 16
        %v1257 = vshll.u32 %v1144, 16
        %v1259 = vrot.slane %v1257, 1
        %v1260 = vor.u32 %v1255, %v1259
        %v1262 = vshll.u32 %v1160, 16
        %v1264 = vrot.slane %v1262, 1
        %v1265 = vsel %vm1169, %v1260, %v1264
        %v1267 = vshrl.u32 %v1145, 16
        %v1269 = vshll.u32 %v1145, 16
        %v1271 = vrot.slane %v1269, 1
        %v1272 = vor.u32 %v1267, %v1271
        %v1274 = vshll.u32 %v1161, 16
        %v1276 = vrot.slane %v1274, 1
        %v1277 = vsel %vm1169, %v1272, %v1276
        %v1279 = vshrl.u32 %v1146, 16
        %v1281 = vshll.u32 %v1146, 16
        %v1283 = vrot.slane %v1281, 1
        %v1284 = vor.u32 %v1279, %v1283
        %v1286 = vshll.u32 %v1162, 16
        %v1288 = vrot.slane %v1286, 1
        %v1289 = vsel %vm1169, %v1284, %v1288
        %v1291 = vshrl.u32 %v1147, 16
        %v1293 = vshll.u32 %v1147, 16
        %v1295 = vrot.slane %v1293, 1
        %v1296 = vor.u32 %v1291, %v1295
        %v1298 = vshll.u32 %v1163, 16
        %v1300 = vrot.slane %v1298, 1
        %v1301 = vsel %vm1169, %v1296, %v1300
        %v1303 = vshrl.u32 %v1148, 16
        %v1305 = vshll.u32 %v1148, 16
        %v1307 = vrot.slane %v1305, 1
        %v1308 = vor.u32 %v1303, %v1307
        %v1310 = vshll.u32 %v1164, 16
        %v1312 = vrot.slane %v1310, 1
        %v1313 = vsel %vm1169, %v1308, %v1312
        %v1315 = vshrl.u32 %v1149, 16
        %v1317 = vshll.u32 %v1149, 16
        %v1319 = vrot.slane %v1317, 1
        %v1320 = vor.u32 %v1315, %v1319
        %v1322 = vshll.u32 %v1165, 16
        %v1324 = vrot.slane %v1322, 1
        %v1325 = vsel %vm1169, %v1320, %v1324
        %v1327 = vshrl.u32 %v1150, 16
        %v1329 = vshll.u32 %v1150, 16
        %v1331 = vrot.slane %v1329, 1
        %v1332 = vor.u32 %v1327, %v1331
        %v1334 = vshll.u32 %v1166, 16
        %v1336 = vrot.slane %v1334, 1
        %v1337 = vsel %vm1169, %v1332, %v1336
        %v1339 = vshrl.u32 %v1151, 16
        %v1341 = vshll.u32 %v1151, 16
        %v1343 = vrot.slane %v1341, 1
        %v1344 = vor.u32 %v1339, %v1343
        %v1346 = vshll.u32 %v1167, 16
        %v1348 = vrot.slane %v1346, 1
        %v1349 = vsel %vm1169, %v1344, %v1348
        %v1351 = vshrl.u32 %v1152, 16
        %v1353 = vshll.u32 %v1152, 16
        %v1355 = vrot.slane %v1353, 1
        %v1356 = vor.u32 %v1351, %v1355
        %v1358 = vshll.u32 %v1168, 16
        %v1360 = vrot.slane %v1358, 1
        %v1361 = vsel %vm1169, %v1356, %v1360
        %1362 = vrot.lane.b32.xlu0 %v1181, 32
        %v1363 = vpop.permute.xlu0 %1362
        %1364 = vrot.lane.b32.xlu0 %v1193, 32
        %v1365 = vpop.permute.xlu0 %1364
        %1366 = vrot.lane.b32.xlu0 %v1205, 32
        %v1367 = vpop.permute.xlu0 %1366
        %1368 = vrot.lane.b32.xlu0 %v1217, 32
        %v1369 = vpop.permute.xlu0 %1368
        %1370 = vrot.lane.b32.xlu0 %v1229, 32
        %v1371 = vpop.permute.xlu0 %1370
        %1372 = vrot.lane.b32.xlu0 %v1241, 32
        %v1373 = vpop.permute.xlu0 %1372
        %1374 = vrot.lane.b32.xlu0 %v1253, 32
        %v1375 = vpop.permute.xlu0 %1374
        %1376 = vrot.lane.b32.xlu0 %v1265, 32
        %v1377 = vpop.permute.xlu0 %1376
        %1378 = vrot.lane.b32.xlu0 %v1277, 32
        %v1379 = vpop.permute.xlu0 %1378
        %1380 = vrot.lane.b32.xlu0 %v1289, 32
        %v1381 = vpop.permute.xlu0 %1380
        %1382 = vrot.lane.b32.xlu0 %v1301, 32
        %v1383 = vpop.permute.xlu0 %1382
        %1384 = vrot.lane.b32.xlu0 %v1313, 32
        %v1385 = vpop.permute.xlu0 %1384
        %1386 = vrot.lane.b32.xlu0 %v1325, 32
        %v1387 = vpop.permute.xlu0 %1386
        %1388 = vrot.lane.b32.xlu0 %v1337, 32
        %v1389 = vpop.permute.xlu0 %1388
        %1390 = vrot.lane.b32.xlu0 %v1349, 32
        %v1391 = vpop.permute.xlu0 %1390
        %1392 = vrot.lane.b32.xlu0 %v1361, 32
        %v1393 = vpop.permute.xlu0 %1392
        %vm1426 = vcmask 1046528
        %v1427 = vrot.slane %v1137, 1
        %v1428 = vrot.slane %v1153, 1
        %v1429 = vsel %vm1426, %v1427, %v1428
        %v1430 = vrot.slane %v1138, 1
        %v1431 = vrot.slane %v1154, 1
        %v1432 = vsel %vm1426, %v1430, %v1431
        %v1433 = vrot.slane %v1139, 1
        %v1434 = vrot.slane %v1155, 1
        %v1435 = vsel %vm1426, %v1433, %v1434
        %v1436 = vrot.slane %v1140, 1
        %v1437 = vrot.slane %v1156, 1
        %v1438 = vsel %vm1426, %v1436, %v1437
        %v1439 = vrot.slane %v1141, 1
        %v1440 = vrot.slane %v1157, 1
        %v1441 = vsel %vm1426, %v1439, %v1440
        %v1442 = vrot.slane %v1142, 1
        %v1443 = vrot.slane %v1158, 1
        %v1444 = vsel %vm1426, %v1442, %v1443
        %v1445 = vrot.slane %v1143, 1
        %v1446 = vrot.slane %v1159, 1
        %v1447 = vsel %vm1426, %v1445, %v1446
        %v1448 = vrot.slane %v1144, 1
        %v1449 = vrot.slane %v1160, 1
        %v1450 = vsel %vm1426, %v1448, %v1449
        %v1451 = vrot.slane %v1145, 1
        %v1452 = vrot.slane %v1161, 1
        %v1453 = vsel %vm1426, %v1451, %v1452
        %v1454 = vrot.slane %v1146, 1
        %v1455 = vrot.slane %v1162, 1
        %v1456 = vsel %vm1426, %v1454, %v1455
        %v1457 = vrot.slane %v1147, 1
        %v1458 = vrot.slane %v1163, 1
        %v1459 = vsel %vm1426, %v1457, %v1458
        %v1460 = vrot.slane %v1148, 1
        %v1461 = vrot.slane %v1164, 1
        %v1462 = vsel %vm1426, %v1460, %v1461
        %v1463 = vrot.slane %v1149, 1
        %v1464 = vrot.slane %v1165, 1
        %v1465 = vsel %vm1426, %v1463, %v1464
        %v1466 = vrot.slane %v1150, 1
        %v1467 = vrot.slane %v1166, 1
        %v1468 = vsel %vm1426, %v1466, %v1467
        %v1469 = vrot.slane %v1151, 1
        %v1470 = vrot.slane %v1167, 1
        %v1471 = vsel %vm1426, %v1469, %v1470
        %v1472 = vrot.slane %v1152, 1
        %v1473 = vrot.slane %v1168, 1
        %v1474 = vsel %vm1426, %v1472, %v1473
        %1475 = vrot.lane.b32.xlu0 %v1429, 64
        %v1476 = vpop.permute.xlu0 %1475
        %1477 = vrot.lane.b32.xlu0 %v1432, 64
        %v1478 = vpop.permute.xlu0 %1477
        %1479 = vrot.lane.b32.xlu0 %v1435, 64
        %v1480 = vpop.permute.xlu0 %1479
        %1481 = vrot.lane.b32.xlu0 %v1438, 64
        %v1482 = vpop.permute.xlu0 %1481
        %1483 = vrot.lane.b32.xlu0 %v1441, 64
        %v1484 = vpop.permute.xlu0 %1483
        %1485 = vrot.lane.b32.xlu0 %v1444, 64
        %v1486 = vpop.permute.xlu0 %1485
        %1487 = vrot.lane.b32.xlu0 %v1447, 64
        %v1488 = vpop.permute.xlu0 %1487
        %1489 = vrot.lane.b32.xlu0 %v1450, 64
        %v1490 = vpop.permute.xlu0 %1489
        %1491 = vrot.lane.b32.xlu0 %v1453, 64
        %v1492 = vpop.permute.xlu0 %1491
        %1493 = vrot.lane.b32.xlu0 %v1456, 64
        %v1494 = vpop.permute.xlu0 %1493
        %1495 = vrot.lane.b32.xlu0 %v1459, 64
        %v1496 = vpop.permute.xlu0 %1495
        %1497 = vrot.lane.b32.xlu0 %v1462, 64
        %v1498 = vpop.permute.xlu0 %1497
        %1499 = vrot.lane.b32.xlu0 %v1465, 64
        %v1500 = vpop.permute.xlu0 %1499
        %1501 = vrot.lane.b32.xlu0 %v1468, 64
        %v1502 = vpop.permute.xlu0 %1501
        %1503 = vrot.lane.b32.xlu0 %v1471, 64
        %v1504 = vpop.permute.xlu0 %1503
        %1505 = vrot.lane.b32.xlu0 %v1474, 64
        %v1506 = vpop.permute.xlu0 %1505
        %vm1507 = vcmask 261120
        %v1509 = vsel %vm1507, %v1137, %v1363
        %v1511 = vsel %vm1507, %v1138, %v1365
        %v1513 = vsel %vm1507, %v1139, %v1367
        %v1515 = vsel %vm1507, %v1140, %v1369
        %v1517 = vsel %vm1507, %v1141, %v1371
        %v1519 = vsel %vm1507, %v1142, %v1373
        %v1521 = vsel %vm1507, %v1143, %v1375
        %v1523 = vsel %vm1507, %v1144, %v1377
        %v1525 = vsel %vm1507, %v1145, %v1379
        %v1527 = vsel %vm1507, %v1146, %v1381
        %v1529 = vsel %vm1507, %v1147, %v1383
        %v1531 = vsel %vm1507, %v1148, %v1385
        %v1533 = vsel %vm1507, %v1149, %v1387
        %v1535 = vsel %vm1507, %v1150, %v1389
        %v1537 = vsel %vm1507, %v1151, %v1391
        %v1539 = vsel %vm1507, %v1152, %v1393
        %vm1540 = vcmask 523264
        %v1542 = vsel %vm1540, %v1509, %v1476
        %v1544 = vsel %vm1540, %v1511, %v1478
        %v1546 = vsel %vm1540, %v1513, %v1480
        %v1548 = vsel %vm1540, %v1515, %v1482
        %v1550 = vsel %vm1540, %v1517, %v1484
        %v1552 = vsel %vm1540, %v1519, %v1486
        %v1554 = vsel %vm1540, %v1521, %v1488
        %v1556 = vsel %vm1540, %v1523, %v1490
        %v1558 = vsel %vm1540, %v1525, %v1492
        %v1560 = vsel %vm1540, %v1527, %v1494
        %v1562 = vsel %vm1540, %v1529, %v1496
        %v1564 = vsel %vm1540, %v1531, %v1498
        %v1566 = vsel %vm1540, %v1533, %v1500
        %v1568 = vsel %vm1540, %v1535, %v1502
        %v1570 = vsel %vm1540, %v1537, %v1504
        %v1572 = vsel %vm1540, %v1539, %v1506
        %v1573 = vld [vmem:[#allocation2] sm:$0xf]
        %v1574 = vld [vmem:[#allocation2 + $0x4] sm:$0xf]
        %v1575 = vld [vmem:[#allocation2 + $0x8] sm:$0xf]
        %v1576 = vld [vmem:[#allocation2 + $0xc] sm:$0xf]
        %v1577 = vld [vmem:[#allocation2 + $0x10] sm:$0xf]
        %v1578 = vld [vmem:[#allocation2 + $0x14] sm:$0xf]
        %v1579 = vld [vmem:[#allocation2 + $0x18] sm:$0xf]
        %v1580 = vld [vmem:[#allocation2 + $0x1c] sm:$0xf]
        %v1581 = vld [vmem:[#allocation2 + $0x20] sm:$0xf]
        %v1582 = vld [vmem:[#allocation2 + $0x24] sm:$0xf]
        %v1583 = vld [vmem:[#allocation2 + $0x28] sm:$0xf]
        %v1584 = vld [vmem:[#allocation2 + $0x2c] sm:$0xf]
        %v1597 = vunpack.c.l.b16 %v1573
        %v1598 = vunpack.c.l.b16 %v1574
        %v1599 = vunpack.c.l.b16 %v1575
        %v1600 = vunpack.c.l.b16 %v1576
        %v1601 = vunpack.c.l.b16 %v1577
        %v1602 = vunpack.c.l.b16 %v1578
        %v1603 = vunpack.c.l.b16 %v1579
        %v1604 = vunpack.c.l.b16 %v1580
        %v1605 = vunpack.c.l.b16 %v1581
        %v1606 = vunpack.c.l.b16 %v1582
        %v1607 = vunpack.c.l.b16 %v1583
        %v1608 = vunpack.c.l.b16 %v1584
        %v1609 = vpack.c.b16 %v1598, %v1597
        %v1610 = vpack.c.b16 %v1600, %v1599
        %v1611 = vpack.c.b16 %v1602, %v1601
        %v1612 = vpack.c.b16 %v1604, %v1603
        %v1613 = vpack.c.b16 %v1606, %v1605
        %v1614 = vpack.c.b16 %v1608, %v1607
        %vm1621 = vcmask 785408
        %v1623 = vsel %vm1621, 0, 0
        %v1625 = vsel %vm1621, %v1542, 0
        %v1627 = vsel %vm1621, %v1544, 0
        %v1629 = vsel %vm1621, %v1546, 0
        %v1631 = vsel %vm1621, %v1548, 0
        %v1633 = vsel %vm1621, %v1550, 0
        %v1635 = vsel %vm1621, %v1552, 0
        %v1637 = vsel %vm1621, %v1554, 0
        %v1639 = vsel %vm1621, %v1556, 0
        %v1641 = vsel %vm1621, %v1558, 0
        %v1643 = vsel %vm1621, %v1560, 0
        %v1645 = vsel %vm1621, %v1562, 0
        %v1647 = vsel %vm1621, %v1564, 0
        %v1649 = vsel %vm1621, %v1566, 0
        %v1651 = vsel %vm1621, %v1568, 0
        %v1653 = vsel %vm1621, %v1570, 0
        %1655 = vmatprep.subr.bf16.mxu0 0
        %1656 = vmatpush1.bf16.msra.mxu0 %v1609
        %1657 = vmatprep.subr.bf16.mxu0 0
        %1658 = vmatpush1.bf16.msra.mxu0 %v1610
        %1659 = vmatprep.subr.bf16.mxu0 0
        %1660 = vmatpush1.bf16.msra.mxu0 %v1611
        %1661 = vmatprep.subr.bf16.mxu0 0
        %1662 = vmatpush1.bf16.msra.mxu0 %v1612
        %1663 = vmatprep.subr.bf16.mxu0 0
        %1664 = vmatpush1.bf16.msra.mxu0 %v1613
        %1665 = vmatprep.subr.bf16.mxu0 0
        %1666 = vmatpush1.bf16.msra.mxu0 %v1614
        %1667 = vmatprep.subr.bf16.mxu0 0
        %1668 = vmatpush1.bf16.msra.mxu0 0
        %1669 = vmatprep.subr.bf16.mxu0 0
        %1670 = vmatpush1.bf16.msra.mxu0 0
        %1671 = vmatprep.subr.bf16.mxu0 0
        %1672 = vmatpush1.bf16.msra.mxu0 0
        %1673 = vmatprep.subr.bf16.mxu0 0
        %1674 = vmatpush1.bf16.msra.mxu0 0
        %1675 = vmatprep.subr.bf16.mxu0 0
        %1676 = vmatpush1.bf16.msra.mxu0 0
        %1677 = vmatprep.subr.bf16.mxu0 0
        %1678 = vmatpush1.bf16.msra.mxu0 0
        %1679 = vmatprep.subr.bf16.mxu0 0
        %1680 = vmatpush1.bf16.msra.mxu0 0
        %1681 = vmatprep.subr.bf16.mxu0 0
        %1682 = vmatpush1.bf16.msra.mxu0 0
        %1683 = vmatprep.subr.bf16.mxu0 0
        %1684 = vmatpush1.bf16.msra.mxu0 0
        %1685 = vmatprep.subr.bf16.mxu0 0
        %1686 = vmatpush1.bf16.msra.mxu0 0
        %1687 = vmatprep.mubr.bf16.mxu0 0
        %1688 = vmatmul.mubr.bf16.gmra.mrb[0].mxu0 %v1623
        %v1689 = vpop.f32.mrb[0].mxu0
        %v1690 = vadd.f32 0.0, %v1689
        %v1691 = vpop.f32.mrb[0].mxu0
        %v1692 = vpop.f32.mrb[0].mxu0
        %v1693 = vadd.f32 0.0, %v1692
        %v1694 = vpop.f32.mrb[0].mxu0
        %1695 = vmatprep.mubr.bf16.mxu0 0
        %1696 = vmatmul.mubr.bf16.gmra.mrb[0].mxu0 %v1625
        %v1697 = vpop.f32.mrb[0].mxu0
        %v1698 = vadd.f32 0.0, %v1697
        %v1699 = vpop.f32.mrb[0].mxu0
        %v1700 = vpop.f32.mrb[0].mxu0
        %v1701 = vadd.f32 0.0, %v1700
        %v1702 = vpop.f32.mrb[0].mxu0
        %1703 = vmatprep.mubr.bf16.mxu0 0
        %1704 = vmatmul.mubr.bf16.gmra.mrb[0].mxu0 %v1627
        %v1705 = vpop.f32.mrb[0].mxu0
        %v1706 = vadd.f32 0.0, %v1705
        %v1707 = vpop.f32.mrb[0].mxu0
        %v1708 = vpop.f32.mrb[0].mxu0
        %v1709 = vadd.f32 0.0, %v1708
        %v1710 = vpop.f32.mrb[0].mxu0
        %1711 = vmatprep.mubr.bf16.mxu0 0
        %1712 = vmatmul.mubr.bf16.gmra.mrb[0].mxu0 %v1629
        %v1713 = vpop.f32.mrb[0].mxu0
        %v1714 = vadd.f32 0.0, %v1713
        %v1715 = vpop.f32.mrb[0].mxu0
        %v1716 = vpop.f32.mrb[0].mxu0
        %v1717 = vadd.f32 0.0, %v1716
        %v1718 = vpop.f32.mrb[0].mxu0
        %1719 = vmatprep.mubr.bf16.mxu0 0
        %1720 = vmatmul.mubr.bf16.gmra.mrb[0].mxu0 %v1631
        %v1721 = vpop.f32.mrb[0].mxu0
        %v1722 = vadd.f32 0.0, %v1721
        %v1723 = vpop.f32.mrb[0].mxu0
        %v1724 = vpop.f32.mrb[0].mxu0
        %v1725 = vadd.f32 0.0, %v1724
        %v1726 = vpop.f32.mrb[0].mxu0
        %1727 = vmatprep.mubr.bf16.mxu0 0
        %1728 = vmatmul.mubr.bf16.gmra.mrb[0].mxu0 %v1633
        %v1729 = vpop.f32.mrb[0].mxu0
        %v1730 = vadd.f32 0.0, %v1729
        %v1731 = vpop.f32.mrb[0].mxu0
        %v1732 = vpop.f32.mrb[0].mxu0
        %v1733 = vadd.f32 0.0, %v1732
        %v1734 = vpop.f32.mrb[0].mxu0
        %1735 = vmatprep.mubr.bf16.mxu0 0
        %1736 = vmatmul.mubr.bf16.gmra.mrb[0].mxu0 %v1635
        %v1737 = vpop.f32.mrb[0].mxu0
        %v1738 = vadd.f32 0.0, %v1737
        %v1739 = vpop.f32.mrb[0].mxu0
        %v1740 = vpop.f32.mrb[0].mxu0
        %v1741 = vadd.f32 0.0, %v1740
        %v1742 = vpop.f32.mrb[0].mxu0
        %1743 = vmatprep.mubr.bf16.mxu0 0
        %1744 = vmatmul.mubr.bf16.gmra.mrb[0].mxu0 %v1637
        %v1745 = vpop.f32.mrb[0].mxu0
        %v1746 = vadd.f32 0.0, %v1745
        %v1747 = vpop.f32.mrb[0].mxu0
        %v1748 = vpop.f32.mrb[0].mxu0
        %v1749 = vadd.f32 0.0, %v1748
        %v1750 = vpop.f32.mrb[0].mxu0
        %1751 = vmatprep.mubr.bf16.mxu0 0
        %1752 = vmatmul.mubr.bf16.gmra.mrb[0].mxu0 %v1639
        %v1753 = vpop.f32.mrb[0].mxu0
        %v1754 = vadd.f32 0.0, %v1753
        %v1755 = vpop.f32.mrb[0].mxu0
        %v1756 = vpop.f32.mrb[0].mxu0
        %v1757 = vadd.f32 0.0, %v1756
        %v1758 = vpop.f32.mrb[0].mxu0
        %1759 = vmatprep.mubr.bf16.mxu0 0
        %1760 = vmatmul.mubr.bf16.gmra.mrb[0].mxu0 %v1641
        %v1761 = vpop.f32.mrb[0].mxu0
        %v1762 = vadd.f32 0.0, %v1761
        %v1763 = vpop.f32.mrb[0].mxu0
        %v1764 = vpop.f32.mrb[0].mxu0
        %v1765 = vadd.f32 0.0, %v1764
        %v1766 = vpop.f32.mrb[0].mxu0
        %1767 = vmatprep.mubr.bf16.mxu0 0
        %1768 = vmatmul.mubr.bf16.gmra.mrb[0].mxu0 %v1643
        %v1769 = vpop.f32.mrb[0].mxu0
        %v1770 = vadd.f32 0.0, %v1769
        %v1771 = vpop.f32.mrb[0].mxu0
        %v1772 = vpop.f32.mrb[0].mxu0
        %v1773 = vadd.f32 0.0, %v1772
        %v1774 = vpop.f32.mrb[0].mxu0
        %1775 = vmatprep.mubr.bf16.mxu0 0
        %1776 = vmatmul.mubr.bf16.gmra.mrb[0].mxu0 %v1645
        %v1777 = vpop.f32.mrb[0].mxu0
        %v1778 = vadd.f32 0.0, %v1777
        %v1779 = vpop.f32.mrb[0].mxu0
        %v1780 = vpop.f32.mrb[0].mxu0
        %v1781 = vadd.f32 0.0, %v1780
        %v1782 = vpop.f32.mrb[0].mxu0
        %1783 = vmatprep.mubr.bf16.mxu0 0
        %1784 = vmatmul.mubr.bf16.gmra.mrb[0].mxu0 %v1647
        %v1785 = vpop.f32.mrb[0].mxu0
        %v1786 = vadd.f32 0.0, %v1785
        %v1787 = vpop.f32.mrb[0].mxu0
        %v1788 = vpop.f32.mrb[0].mxu0
        %v1789 = vadd.f32 0.0, %v1788
        %v1790 = vpop.f32.mrb[0].mxu0
        %1791 = vmatprep.mubr.bf16.mxu0 0
        %1792 = vmatmul.mubr.bf16.gmra.mrb[0].mxu0 %v1649
        %v1793 = vpop.f32.mrb[0].mxu0
        %v1794 = vadd.f32 0.0, %v1793
        %v1795 = vpop.f32.mrb[0].mxu0
        %v1796 = vpop.f32.mrb[0].mxu0
        %v1797 = vadd.f32 0.0, %v1796
        %v1798 = vpop.f32.mrb[0].mxu0
        %1799 = vmatprep.mubr.bf16.mxu0 0
        %1800 = vmatmul.mubr.bf16.gmra.mrb[0].mxu0 %v1651
        %v1801 = vpop.f32.mrb[0].mxu0
        %v1802 = vadd.f32 0.0, %v1801
        %v1803 = vpop.f32.mrb[0].mxu0
        %v1804 = vpop.f32.mrb[0].mxu0
        %v1805 = vadd.f32 0.0, %v1804
        %v1806 = vpop.f32.mrb[0].mxu0
        %1807 = vmatprep.mubr.bf16.mxu0 0
        %1808 = vmatmul.mubr.bf16.gmra.mrb[0].mxu0 %v1653
        %v1809 = vpop.f32.mrb[0].mxu0
        %v1810 = vadd.f32 0.0, %v1809
        %v1811 = vpop.f32.mrb[0].mxu0
        %v1812 = vpop.f32.mrb[0].mxu0
        %v1813 = vadd.f32 0.0, %v1812
        %v1814 = vpop.f32.mrb[0].mxu0
        %1815 = vdwg.mxu0
        %v1816 = vadd.f32 %v592, %v1690
        %v1817 = vadd.f32 %v595, %v1693
        %v1818 = vadd.f32 %v600, %v1698
        %v1819 = vadd.f32 %v603, %v1701
        %v1820 = vadd.f32 %v608, %v1706
        %v1821 = vadd.f32 %v611, %v1709
        %v1822 = vadd.f32 %v616, %v1714
        %v1823 = vadd.f32 %v619, %v1717
        %v1824 = vadd.f32 %v624, %v1722
        %v1825 = vadd.f32 %v627, %v1725
        %v1826 = vadd.f32 %v632, %v1730
        %v1827 = vadd.f32 %v635, %v1733
        %v1828 = vadd.f32 %v640, %v1738
        %v1829 = vadd.f32 %v643, %v1741
        %v1830 = vadd.f32 %v648, %v1746
        %v1831 = vadd.f32 %v651, %v1749
        %v1832 = vadd.f32 %v656, %v1754
        %v1833 = vadd.f32 %v659, %v1757
        %v1834 = vadd.f32 %v664, %v1762
        %v1835 = vadd.f32 %v667, %v1765
        %v1836 = vadd.f32 %v672, %v1770
        %v1837 = vadd.f32 %v675, %v1773
        %v1838 = vadd.f32 %v680, %v1778
        %v1839 = vadd.f32 %v683, %v1781
        %v1840 = vadd.f32 %v688, %v1786
        %v1841 = vadd.f32 %v691, %v1789
        %v1842 = vadd.f32 %v696, %v1794
        %v1843 = vadd.f32 %v699, %v1797
        %v1844 = vadd.f32 %v704, %v1802
        %v1845 = vadd.f32 %v707, %v1805
        %v1846 = vadd.f32 %v712, %v1810
        %v1847 = vadd.f32 %v715, %v1813
        %s1848 = scalar_lea.vmem [#allocation2], 48
        %v1849 = vld [vmem:[%s1848] sm:$0xf]
        %v1850 = vld [vmem:[%s1848 + $0x4] sm:$0xf]
        %v1851 = vld [vmem:[%s1848 + $0x8] sm:$0xf]
        %v1852 = vld [vmem:[%s1848 + $0xc] sm:$0xf]
        %v1853 = vld [vmem:[%s1848 + $0x10] sm:$0xf]
        %v1854 = vld [vmem:[%s1848 + $0x14] sm:$0xf]
        %v1855 = vld [vmem:[%s1848 + $0x18] sm:$0xf]
        %v1856 = vld [vmem:[%s1848 + $0x1c] sm:$0xf]
        %v1857 = vld [vmem:[%s1848 + $0x20] sm:$0xf]
        %v1858 = vld [vmem:[%s1848 + $0x24] sm:$0xf]
        %v1859 = vld [vmem:[%s1848 + $0x28] sm:$0xf]
        %v1860 = vld [vmem:[%s1848 + $0x2c] sm:$0xf]
        %v1873 = vunpack.c.l.b16 %v1849
        %v1874 = vunpack.c.l.b16 %v1850
        %v1875 = vunpack.c.l.b16 %v1851
        %v1876 = vunpack.c.l.b16 %v1852
        %v1877 = vunpack.c.l.b16 %v1853
        %v1878 = vunpack.c.l.b16 %v1854
        %v1879 = vunpack.c.l.b16 %v1855
        %v1880 = vunpack.c.l.b16 %v1856
        %v1881 = vunpack.c.l.b16 %v1857
        %v1882 = vunpack.c.l.b16 %v1858
        %v1883 = vunpack.c.l.b16 %v1859
        %v1884 = vunpack.c.l.b16 %v1860
        %v1885 = vpack.c.b16 %v1874, %v1873
        %v1886 = vpack.c.b16 %v1876, %v1875
        %v1887 = vpack.c.b16 %v1878, %v1877
        %v1888 = vpack.c.b16 %v1880, %v1879
        %v1889 = vpack.c.b16 %v1882, %v1881
        %v1890 = vpack.c.b16 %v1884, %v1883
        %v1897 = vsel %vm1621, %v1572, 0
        %1899 = vmatprep.subr.bf16.mxu0 0
        %1900 = vmatpush1.bf16.msra.mxu0 %v1885
        %1901 = vmatprep.subr.bf16.mxu0 0
        %1902 = vmatpush1.bf16.msra.mxu0 %v1886
        %1903 = vmatprep.subr.bf16.mxu0 0
        %1904 = vmatpush1.bf16.msra.mxu0 %v1887
        %1905 = vmatprep.subr.bf16.mxu0 0
        %1906 = vmatpush1.bf16.msra.mxu0 %v1888
        %1907 = vmatprep.subr.bf16.mxu0 0
        %1908 = vmatpush1.bf16.msra.mxu0 %v1889
        %1909 = vmatprep.subr.bf16.mxu0 0
        %1910 = vmatpush1.bf16.msra.mxu0 %v1890
        %1911 = vmatprep.subr.bf16.mxu0 0
        %1912 = vmatpush1.bf16.msra.mxu0 0
        %1913 = vmatprep.subr.bf16.mxu0 0
        %1914 = vmatpush1.bf16.msra.mxu0 0
        %1915 = vmatprep.subr.bf16.mxu0 0
        %1916 = vmatpush1.bf16.msra.mxu0 0
        %1917 = vmatprep.subr.bf16.mxu0 0
        %1918 = vmatpush1.bf16.msra.mxu0 0
        %1919 = vmatprep.subr.bf16.mxu0 0
        %1920 = vmatpush1.bf16.msra.mxu0 0
        %1921 = vmatprep.subr.bf16.mxu0 0
        %1922 = vmatpush1.bf16.msra.mxu0 0
        %1923 = vmatprep.subr.bf16.mxu0 0
        %1924 = vmatpush1.bf16.msra.mxu0 0
        %1925 = vmatprep.subr.bf16.mxu0 0
        %1926 = vmatpush1.bf16.msra.mxu0 0
        %1927 = vmatprep.subr.bf16.mxu0 0
        %1928 = vmatpush1.bf16.msra.mxu0 0
        %1929 = vmatprep.subr.bf16.mxu0 0
        %1930 = vmatpush1.bf16.msra.mxu0 0
        %1931 = vmatprep.mubr.bf16.mxu0 0
        %1932 = vmatmul.mubr.bf16.gmra.mrb[0].mxu0 %v1625
        %v1933 = vpop.f32.mrb[0].mxu0
        %v1934 = vadd.f32 0.0, %v1933
        %v1935 = vpop.f32.mrb[0].mxu0
        %v1936 = vpop.f32.mrb[0].mxu0
        %v1937 = vadd.f32 0.0, %v1936
        %v1938 = vpop.f32.mrb[0].mxu0
        %1939 = vmatprep.mubr.bf16.mxu0 0
        %1940 = vmatmul.mubr.bf16.gmra.mrb[0].mxu0 %v1627
        %v1941 = vpop.f32.mrb[0].mxu0
        %v1942 = vadd.f32 0.0, %v1941
        %v1943 = vpop.f32.mrb[0].mxu0
        %v1944 = vpop.f32.mrb[0].mxu0
        %v1945 = vadd.f32 0.0, %v1944
        %v1946 = vpop.f32.mrb[0].mxu0
        %1947 = vmatprep.mubr.bf16.mxu0 0
        %1948 = vmatmul.mubr.bf16.gmra.mrb[0].mxu0 %v1629
        %v1949 = vpop.f32.mrb[0].mxu0
        %v1950 = vadd.f32 0.0, %v1949
        %v1951 = vpop.f32.mrb[0].mxu0
        %v1952 = vpop.f32.mrb[0].mxu0
        %v1953 = vadd.f32 0.0, %v1952
        %v1954 = vpop.f32.mrb[0].mxu0
        %1955 = vmatprep.mubr.bf16.mxu0 0
        %1956 = vmatmul.mubr.bf16.gmra.mrb[0].mxu0 %v1631
        %v1957 = vpop.f32.mrb[0].mxu0
        %v1958 = vadd.f32 0.0, %v1957
        %v1959 = vpop.f32.mrb[0].mxu0
        %v1960 = vpop.f32.mrb[0].mxu0
        %v1961 = vadd.f32 0.0, %v1960
        %v1962 = vpop.f32.mrb[0].mxu0
        %1963 = vmatprep.mubr.bf16.mxu0 0
        %1964 = vmatmul.mubr.bf16.gmra.mrb[0].mxu0 %v1633
        %v1965 = vpop.f32.mrb[0].mxu0
        %v1966 = vadd.f32 0.0, %v1965
        %v1967 = vpop.f32.mrb[0].mxu0
        %v1968 = vpop.f32.mrb[0].mxu0
        %v1969 = vadd.f32 0.0, %v1968
        %v1970 = vpop.f32.mrb[0].mxu0
        %1971 = vmatprep.mubr.bf16.mxu0 0
        %1972 = vmatmul.mubr.bf16.gmra.mrb[0].mxu0 %v1635
        %v1973 = vpop.f32.mrb[0].mxu0
        %v1974 = vadd.f32 0.0, %v1973
        %v1975 = vpop.f32.mrb[0].mxu0
        %v1976 = vpop.f32.mrb[0].mxu0
        %v1977 = vadd.f32 0.0, %v1976
        %v1978 = vpop.f32.mrb[0].mxu0
        %1979 = vmatprep.mubr.bf16.mxu0 0
        %1980 = vmatmul.mubr.bf16.gmra.mrb[0].mxu0 %v1637
        %v1981 = vpop.f32.mrb[0].mxu0
        %v1982 = vadd.f32 0.0, %v1981
        %v1983 = vpop.f32.mrb[0].mxu0
        %v1984 = vpop.f32.mrb[0].mxu0
        %v1985 = vadd.f32 0.0, %v1984
        %v1986 = vpop.f32.mrb[0].mxu0
        %1987 = vmatprep.mubr.bf16.mxu0 0
        %1988 = vmatmul.mubr.bf16.gmra.mrb[0].mxu0 %v1639
        %v1989 = vpop.f32.mrb[0].mxu0
        %v1990 = vadd.f32 0.0, %v1989
        %v1991 = vpop.f32.mrb[0].mxu0
        %v1992 = vpop.f32.mrb[0].mxu0
        %v1993 = vadd.f32 0.0, %v1992
        %v1994 = vpop.f32.mrb[0].mxu0
        %1995 = vmatprep.mubr.bf16.mxu0 0
        %1996 = vmatmul.mubr.bf16.gmra.mrb[0].mxu0 %v1641
        %v1997 = vpop.f32.mrb[0].mxu0
        %v1998 = vadd.f32 0.0, %v1997
        %v1999 = vpop.f32.mrb[0].mxu0
        %v2000 = vpop.f32.mrb[0].mxu0
        %v2001 = vadd.f32 0.0, %v2000
        %v2002 = vpop.f32.mrb[0].mxu0
        %2003 = vmatprep.mubr.bf16.mxu0 0
        %2004 = vmatmul.mubr.bf16.gmra.mrb[0].mxu0 %v1643
        %v2005 = vpop.f32.mrb[0].mxu0
        %v2006 = vadd.f32 0.0, %v2005
        %v2007 = vpop.f32.mrb[0].mxu0
        %v2008 = vpop.f32.mrb[0].mxu0
        %v2009 = vadd.f32 0.0, %v2008
        %v2010 = vpop.f32.mrb[0].mxu0
        %2011 = vmatprep.mubr.bf16.mxu0 0
        %2012 = vmatmul.mubr.bf16.gmra.mrb[0].mxu0 %v1645
        %v2013 = vpop.f32.mrb[0].mxu0
        %v2014 = vadd.f32 0.0, %v2013
        %v2015 = vpop.f32.mrb[0].mxu0
        %v2016 = vpop.f32.mrb[0].mxu0
        %v2017 = vadd.f32 0.0, %v2016
        %v2018 = vpop.f32.mrb[0].mxu0
        %2019 = vmatprep.mubr.bf16.mxu0 0
        %2020 = vmatmul.mubr.bf16.gmra.mrb[0].mxu0 %v1647
        %v2021 = vpop.f32.mrb[0].mxu0
        %v2022 = vadd.f32 0.0, %v2021
        %v2023 = vpop.f32.mrb[0].mxu0
        %v2024 = vpop.f32.mrb[0].mxu0
        %v2025 = vadd.f32 0.0, %v2024
        %v2026 = vpop.f32.mrb[0].mxu0
        %2027 = vmatprep.mubr.bf16.mxu0 0
        %2028 = vmatmul.mubr.bf16.gmra.mrb[0].mxu0 %v1649
        %v2029 = vpop.f32.mrb[0].mxu0
        %v2030 = vadd.f32 0.0, %v2029
        %v2031 = vpop.f32.mrb[0].mxu0
        %v2032 = vpop.f32.mrb[0].mxu0
        %v2033 = vadd.f32 0.0, %v2032
        %v2034 = vpop.f32.mrb[0].mxu0
        %2035 = vmatprep.mubr.bf16.mxu0 0
        %2036 = vmatmul.mubr.bf16.gmra.mrb[0].mxu0 %v1651
        %v2037 = vpop.f32.mrb[0].mxu0
        %v2038 = vadd.f32 0.0, %v2037
        %v2039 = vpop.f32.mrb[0].mxu0
        %v2040 = vpop.f32.mrb[0].mxu0
        %v2041 = vadd.f32 0.0, %v2040
        %v2042 = vpop.f32.mrb[0].mxu0
        %2043 = vmatprep.mubr.bf16.mxu0 0
        %2044 = vmatmul.mubr.bf16.gmra.mrb[0].mxu0 %v1653
        %v2045 = vpop.f32.mrb[0].mxu0
        %v2046 = vadd.f32 0.0, %v2045
        %v2047 = vpop.f32.mrb[0].mxu0
        %v2048 = vpop.f32.mrb[0].mxu0
        %v2049 = vadd.f32 0.0, %v2048
        %v2050 = vpop.f32.mrb[0].mxu0
        %2051 = vmatprep.mubr.bf16.mxu0 0
        %2052 = vmatmul.mubr.bf16.gmra.mrb[0].mxu0 %v1897
        %v2053 = vpop.f32.mrb[0].mxu0
        %v2054 = vadd.f32 0.0, %v2053
        %v2055 = vpop.f32.mrb[0].mxu0
        %v2056 = vpop.f32.mrb[0].mxu0
        %v2057 = vadd.f32 0.0, %v2056
        %v2058 = vpop.f32.mrb[0].mxu0
        %2059 = vdwg.mxu0
        %v2060 = vadd.f32 %v1816, %v1934
        %v2061 = vadd.f32 %v1817, %v1937
        %v2062 = vadd.f32 %v1818, %v1942
        %v2063 = vadd.f32 %v1819, %v1945
        %v2064 = vadd.f32 %v1820, %v1950
        %v2065 = vadd.f32 %v1821, %v1953
        %v2066 = vadd.f32 %v1822, %v1958
        %v2067 = vadd.f32 %v1823, %v1961
        %v2068 = vadd.f32 %v1824, %v1966
        %v2069 = vadd.f32 %v1825, %v1969
        %v2070 = vadd.f32 %v1826, %v1974
        %v2071 = vadd.f32 %v1827, %v1977
        %v2072 = vadd.f32 %v1828, %v1982
        %v2073 = vadd.f32 %v1829, %v1985
        %v2074 = vadd.f32 %v1830, %v1990
        %v2075 = vadd.f32 %v1831, %v1993
        %v2076 = vadd.f32 %v1832, %v1998
        %v2077 = vadd.f32 %v1833, %v2001
        %v2078 = vadd.f32 %v1834, %v2006
        %v2079 = vadd.f32 %v1835, %v2009
        %v2080 = vadd.f32 %v1836, %v2014
        %v2081 = vadd.f32 %v1837, %v2017
        %v2082 = vadd.f32 %v1838, %v2022
        %v2083 = vadd.f32 %v1839, %v2025
        %v2084 = vadd.f32 %v1840, %v2030
        %v2085 = vadd.f32 %v1841, %v2033
        %v2086 = vadd.f32 %v1842, %v2038
        %v2087 = vadd.f32 %v1843, %v2041
        %v2088 = vadd.f32 %v1844, %v2046
        %v2089 = vadd.f32 %v1845, %v2049
        %v2090 = vadd.f32 %v1846, %v2054
        %v2091 = vadd.f32 %v1847, %v2057
        %s2092 = scalar_lea.vmem [#allocation2], 96
        %v2093 = vld [vmem:[%s2092] sm:$0xf]
        %v2094 = vld [vmem:[%s2092 + $0x4] sm:$0xf]
        %v2095 = vld [vmem:[%s2092 + $0x8] sm:$0xf]
        %v2096 = vld [vmem:[%s2092 + $0xc] sm:$0xf]
        %v2097 = vld [vmem:[%s2092 + $0x10] sm:$0xf]
        %v2098 = vld [vmem:[%s2092 + $0x14] sm:$0xf]
        %v2099 = vld [vmem:[%s2092 + $0x18] sm:$0xf]
        %v2100 = vld [vmem:[%s2092 + $0x1c] sm:$0xf]
        %v2101 = vld [vmem:[%s2092 + $0x20] sm:$0xf]
        %v2102 = vld [vmem:[%s2092 + $0x24] sm:$0xf]
        %v2103 = vld [vmem:[%s2092 + $0x28] sm:$0xf]
        %v2104 = vld [vmem:[%s2092 + $0x2c] sm:$0xf]
        %v2117 = vunpack.c.l.b16 %v2093
        %v2118 = vunpack.c.l.b16 %v2094
        %v2119 = vunpack.c.l.b16 %v2095
        %v2120 = vunpack.c.l.b16 %v2096
        %v2121 = vunpack.c.l.b16 %v2097
        %v2122 = vunpack.c.l.b16 %v2098
        %v2123 = vunpack.c.l.b16 %v2099
        %v2124 = vunpack.c.l.b16 %v2100
        %v2125 = vunpack.c.l.b16 %v2101
        %v2126 = vunpack.c.l.b16 %v2102
        %v2127 = vunpack.c.l.b16 %v2103
        %v2128 = vunpack.c.l.b16 %v2104
        %v2129 = vpack.c.b16 %v2118, %v2117
        %v2130 = vpack.c.b16 %v2120, %v2119
        %v2131 = vpack.c.b16 %v2122, %v2121
        %v2132 = vpack.c.b16 %v2124, %v2123
        %v2133 = vpack.c.b16 %v2126, %v2125
        %v2134 = vpack.c.b16 %v2128, %v2127
        %2141 = vmatprep.subr.bf16.mxu0 0
        %2142 = vmatpush1.bf16.msra.mxu0 %v2129
        %2143 = vmatprep.subr.bf16.mxu0 0
        %2144 = vmatpush1.bf16.msra.mxu0 %v2130
        %2145 = vmatprep.subr.bf16.mxu0 0
        %2146 = vmatpush1.bf16.msra.mxu0 %v2131
        %2147 = vmatprep.subr.bf16.mxu0 0
        %2148 = vmatpush1.bf16.msra.mxu0 %v2132
        %2149 = vmatprep.subr.bf16.mxu0 0
        %2150 = vmatpush1.bf16.msra.mxu0 %v2133
        %2151 = vmatprep.subr.bf16.mxu0 0
        %2152 = vmatpush1.bf16.msra.mxu0 %v2134
        %2153 = vmatprep.subr.bf16.mxu0 0
        %2154 = vmatpush1.bf16.msra.mxu0 0
        %2155 = vmatprep.subr.bf16.mxu0 0
        %2156 = vmatpush1.bf16.msra.mxu0 0
        %2157 = vmatprep.subr.bf16.mxu0 0
        %2158 = vmatpush1.bf16.msra.mxu0 0
        %2159 = vmatprep.subr.bf16.mxu0 0
        %2160 = vmatpush1.bf16.msra.mxu0 0
        %2161 = vmatprep.subr.bf16.mxu0 0
        %2162 = vmatpush1.bf16.msra.mxu0 0
        %2163 = vmatprep.subr.bf16.mxu0 0
        %2164 = vmatpush1.bf16.msra.mxu0 0
        %2165 = vmatprep.subr.bf16.mxu0 0
        %2166 = vmatpush1.bf16.msra.mxu0 0
        %2167 = vmatprep.subr.bf16.mxu0 0
        %2168 = vmatpush1.bf16.msra.mxu0 0
        %2169 = vmatprep.subr.bf16.mxu0 0
        %2170 = vmatpush1.bf16.msra.mxu0 0
        %2171 = vmatprep.subr.bf16.mxu0 0
        %2172 = vmatpush1.bf16.msra.mxu0 0
        %2173 = vmatprep.mubr.bf16.mxu0 0
        %2174 = vmatmul.mubr.bf16.gmra.mrb[0].mxu0 %v1627
        %v2175 = vpop.f32.mrb[0].mxu0
        %v2176 = vadd.f32 0.0, %v2175
        %v2177 = vpop.f32.mrb[0].mxu0
        %v2178 = vpop.f32.mrb[0].mxu0
        %v2179 = vadd.f32 0.0, %v2178
        %v2180 = vpop.f32.mrb[0].mxu0
        %2181 = vmatprep.mubr.bf16.mxu0 0
        %2182 = vmatmul.mubr.bf16.gmra.mrb[0].mxu0 %v1629
        %v2183 = vpop.f32.mrb[0].mxu0
        %v2184 = vadd.f32 0.0, %v2183
        %v2185 = vpop.f32.mrb[0].mxu0
        %v2186 = vpop.f32.mrb[0].mxu0
        %v2187 = vadd.f32 0.0, %v2186
        %v2188 = vpop.f32.mrb[0].mxu0
        %2189 = vmatprep.mubr.bf16.mxu0 0
        %2190 = vmatmul.mubr.bf16.gmra.mrb[0].mxu0 %v1631
        %v2191 = vpop.f32.mrb[0].mxu0
        %v2192 = vadd.f32 0.0, %v2191
        %v2193 = vpop.f32.mrb[0].mxu0
        %v2194 = vpop.f32.mrb[0].mxu0
        %v2195 = vadd.f32 0.0, %v2194
        %v2196 = vpop.f32.mrb[0].mxu0
        %2197 = vmatprep.mubr.bf16.mxu0 0
        %2198 = vmatmul.mubr.bf16.gmra.mrb[0].mxu0 %v1633
        %v2199 = vpop.f32.mrb[0].mxu0
        %v2200 = vadd.f32 0.0, %v2199
        %v2201 = vpop.f32.mrb[0].mxu0
        %v2202 = vpop.f32.mrb[0].mxu0
        %v2203 = vadd.f32 0.0, %v2202
        %v2204 = vpop.f32.mrb[0].mxu0
        %2205 = vmatprep.mubr.bf16.mxu0 0
        %2206 = vmatmul.mubr.bf16.gmra.mrb[0].mxu0 %v1635
        %v2207 = vpop.f32.mrb[0].mxu0
        %v2208 = vadd.f32 0.0, %v2207
        %v2209 = vpop.f32.mrb[0].mxu0
        %v2210 = vpop.f32.mrb[0].mxu0
        %v2211 = vadd.f32 0.0, %v2210
        %v2212 = vpop.f32.mrb[0].mxu0
        %2213 = vmatprep.mubr.bf16.mxu0 0
        %2214 = vmatmul.mubr.bf16.gmra.mrb[0].mxu0 %v1637
        %v2215 = vpop.f32.mrb[0].mxu0
        %v2216 = vadd.f32 0.0, %v2215
        %v2217 = vpop.f32.mrb[0].mxu0
        %v2218 = vpop.f32.mrb[0].mxu0
        %v2219 = vadd.f32 0.0, %v2218
        %v2220 = vpop.f32.mrb[0].mxu0
        %2221 = vmatprep.mubr.bf16.mxu0 0
        %2222 = vmatmul.mubr.bf16.gmra.mrb[0].mxu0 %v1639
        %v2223 = vpop.f32.mrb[0].mxu0
        %v2224 = vadd.f32 0.0, %v2223
        %v2225 = vpop.f32.mrb[0].mxu0
        %v2226 = vpop.f32.mrb[0].mxu0
        %v2227 = vadd.f32 0.0, %v2226
        %v2228 = vpop.f32.mrb[0].mxu0
        %2229 = vmatprep.mubr.bf16.mxu0 0
        %2230 = vmatmul.mubr.bf16.gmra.mrb[0].mxu0 %v1641
        %v2231 = vpop.f32.mrb[0].mxu0
        %v2232 = vadd.f32 0.0, %v2231
        %v2233 = vpop.f32.mrb[0].mxu0
        %v2234 = vpop.f32.mrb[0].mxu0
        %v2235 = vadd.f32 0.0, %v2234
        %v2236 = vpop.f32.mrb[0].mxu0
        %2237 = vmatprep.mubr.bf16.mxu0 0
        %2238 = vmatmul.mubr.bf16.gmra.mrb[0].mxu0 %v1643
        %v2239 = vpop.f32.mrb[0].mxu0
        %v2240 = vadd.f32 0.0, %v2239
        %v2241 = vpop.f32.mrb[0].mxu0
        %v2242 = vpop.f32.mrb[0].mxu0
        %v2243 = vadd.f32 0.0, %v2242
        %v2244 = vpop.f32.mrb[0].mxu0
        %2245 = vmatprep.mubr.bf16.mxu0 0
        %2246 = vmatmul.mubr.bf16.gmra.mrb[0].mxu0 %v1645
        %v2247 = vpop.f32.mrb[0].mxu0
        %v2248 = vadd.f32 0.0, %v2247
        %v2249 = vpop.f32.mrb[0].mxu0
        %v2250 = vpop.f32.mrb[0].mxu0
        %v2251 = vadd.f32 0.0, %v2250
        %v2252 = vpop.f32.mrb[0].mxu0
        %2253 = vmatprep.mubr.bf16.mxu0 0
        %2254 = vmatmul.mubr.bf16.gmra.mrb[0].mxu0 %v1647
        %v2255 = vpop.f32.mrb[0].mxu0
        %v2256 = vadd.f32 0.0, %v2255
        %v2257 = vpop.f32.mrb[0].mxu0
        %v2258 = vpop.f32.mrb[0].mxu0
        %v2259 = vadd.f32 0.0, %v2258
        %v2260 = vpop.f32.mrb[0].mxu0
        %2261 = vmatprep.mubr.bf16.mxu0 0
        %2262 = vmatmul.mubr.bf16.gmra.mrb[0].mxu0 %v1649
        %v2263 = vpop.f32.mrb[0].mxu0
        %v2264 = vadd.f32 0.0, %v2263
        %v2265 = vpop.f32.mrb[0].mxu0
        %v2266 = vpop.f32.mrb[0].mxu0
        %v2267 = vadd.f32 0.0, %v2266
        %v2268 = vpop.f32.mrb[0].mxu0
        %2269 = vmatprep.mubr.bf16.mxu0 0
        %2270 = vmatmul.mubr.bf16.gmra.mrb[0].mxu0 %v1651
        %v2271 = vpop.f32.mrb[0].mxu0
        %v2272 = vadd.f32 0.0, %v2271
        %v2273 = vpop.f32.mrb[0].mxu0
        %v2274 = vpop.f32.mrb[0].mxu0
        %v2275 = vadd.f32 0.0, %v2274
        %v2276 = vpop.f32.mrb[0].mxu0
        %2277 = vmatprep.mubr.bf16.mxu0 0
        %2278 = vmatmul.mubr.bf16.gmra.mrb[0].mxu0 %v1653
        %v2279 = vpop.f32.mrb[0].mxu0
        %v2280 = vadd.f32 0.0, %v2279
        %v2281 = vpop.f32.mrb[0].mxu0
        %v2282 = vpop.f32.mrb[0].mxu0
        %v2283 = vadd.f32 0.0, %v2282
        %v2284 = vpop.f32.mrb[0].mxu0
        %2285 = vmatprep.mubr.bf16.mxu0 0
        %2286 = vmatmul.mubr.bf16.gmra.mrb[0].mxu0 %v1897
        %v2287 = vpop.f32.mrb[0].mxu0
        %v2288 = vadd.f32 0.0, %v2287
        %v2289 = vpop.f32.mrb[0].mxu0
        %v2290 = vpop.f32.mrb[0].mxu0
        %v2291 = vadd.f32 0.0, %v2290
        %v2292 = vpop.f32.mrb[0].mxu0
        %2293 = vmatprep.mubr.bf16.mxu0 0
        %2294 = vmatmul.mubr.bf16.gmra.mrb[0].mxu0 %v1623
        %v2295 = vpop.f32.mrb[0].mxu0
        %v2296 = vadd.f32 0.0, %v2295
        %v2297 = vpop.f32.mrb[0].mxu0
        %v2298 = vpop.f32.mrb[0].mxu0
        %v2299 = vadd.f32 0.0, %v2298
        %v2300 = vpop.f32.mrb[0].mxu0
        %2301 = vdwg.mxu0
        %v2302 = vadd.f32 %v2060, %v2176
        %v2303 = vadd.f32 %v2061, %v2179
        %v2304 = vadd.f32 %v2062, %v2184
        %v2305 = vadd.f32 %v2063, %v2187
        %v2306 = vadd.f32 %v2064, %v2192
        %v2307 = vadd.f32 %v2065, %v2195
        %v2308 = vadd.f32 %v2066, %v2200
        %v2309 = vadd.f32 %v2067, %v2203
        %v2310 = vadd.f32 %v2068, %v2208
        %v2311 = vadd.f32 %v2069, %v2211
        %v2312 = vadd.f32 %v2070, %v2216
        %v2313 = vadd.f32 %v2071, %v2219
        %v2314 = vadd.f32 %v2072, %v2224
        %v2315 = vadd.f32 %v2073, %v2227
        %v2316 = vadd.f32 %v2074, %v2232
        %v2317 = vadd.f32 %v2075, %v2235
        %v2318 = vadd.f32 %v2076, %v2240
        %v2319 = vadd.f32 %v2077, %v2243
        %v2320 = vadd.f32 %v2078, %v2248
        %v2321 = vadd.f32 %v2079, %v2251
        %v2322 = vadd.f32 %v2080, %v2256
        %v2323 = vadd.f32 %v2081, %v2259
        %v2324 = vadd.f32 %v2082, %v2264
        %v2325 = vadd.f32 %v2083, %v2267
        %v2326 = vadd.f32 %v2084, %v2272
        %v2327 = vadd.f32 %v2085, %v2275
        %v2328 = vadd.f32 %v2086, %v2280
        %v2329 = vadd.f32 %v2087, %v2283
        %v2330 = vadd.f32 %v2088, %v2288
        %v2331 = vadd.f32 %v2089, %v2291
        %v2332 = vadd.f32 %v2090, %v2296
        %v2333 = vadd.f32 %v2091, %v2299
        %v2334 = vadd.f32 %v2302, %v2303
        %v2335 = vadd.f32 %v2334, %v2304
        %v2336 = vadd.f32 %v2335, %v2305
        %v2337 = vadd.f32 %v2336, %v2306
        %v2338 = vadd.f32 %v2337, %v2307
        %v2339 = vadd.f32 %v2338, %v2308
        %v2340 = vadd.f32 %v2339, %v2309
        %v2341 = vadd.f32 %v2340, %v2310
        %v2342 = vadd.f32 %v2341, %v2311
        %v2343 = vadd.f32 %v2342, %v2312
        %v2344 = vadd.f32 %v2343, %v2313
        %v2345 = vadd.f32 %v2344, %v2314
        %v2346 = vadd.f32 %v2345, %v2315
        %v2347 = vadd.f32 %v2346, %v2316
        %v2348 = vadd.f32 %v2347, %v2317
        %v2349 = vadd.f32 %v2348, %v2318
        %v2350 = vadd.f32 %v2349, %v2319
        %v2351 = vadd.f32 %v2350, %v2320
        %v2352 = vadd.f32 %v2351, %v2321
        %v2353 = vadd.f32 %v2352, %v2322
        %v2354 = vadd.f32 %v2353, %v2323
        %v2355 = vadd.f32 %v2354, %v2324
        %v2356 = vadd.f32 %v2355, %v2325
        %v2357 = vadd.f32 %v2356, %v2326
        %v2358 = vadd.f32 %v2357, %v2327
        %v2359 = vadd.f32 %v2358, %v2328
        %v2360 = vadd.f32 %v2359, %v2329
        %v2361 = vadd.f32 %v2360, %v2330
        %v2362 = vadd.f32 %v2361, %v2331
        %v2363 = vadd.f32 %v2362, %v2332
        %v2364 = vadd.f32 %v2363, %v2333
        %v2365 = vrot.slane %v2364, 4
        %v2366 = vadd.f32 %v2364, %v2365
        %v2367 = vrot.slane %v2366, 2
        %v2368 = vadd.f32 %v2366, %v2367
        %v2369 = vrot.slane %v2368, 1
        %v2370 = vadd.f32 %v2368, %v2369
        %v2371 = vld [vmem:[#allocation4] sm:$0xff]
        %v2372 = vld [vmem:[#allocation4 + $0x8] sm:$0xff]
        %v2373 = vld [vmem:[#allocation4 + $0x10] sm:$0xff]
        %v2374 = vld [vmem:[#allocation4 + $0x18] sm:$0xff]
        %v2375 = vld [vmem:[#allocation4 + $0x20] sm:$0xff]
        %v2376 = vld [vmem:[#allocation4 + $0x28] sm:$0xff]
        %v2377 = vld [vmem:[#allocation4 + $0x30] sm:$0xff]
        %v2378 = vld [vmem:[#allocation4 + $0x38] sm:$0xff]
        %v2379 = vld [vmem:[#allocation4 + $0x40] sm:$0xff]
        %v2380 = vld [vmem:[#allocation4 + $0x48] sm:$0xff]
        %v2381 = vld [vmem:[#allocation4 + $0x50] sm:$0xff]
        %v2382 = vld [vmem:[#allocation4 + $0x58] sm:$0xff]
        %v2383 = vld [vmem:[#allocation4 + $0x60] sm:$0xff]
        %v2384 = vld [vmem:[#allocation4 + $0x68] sm:$0xff]
        %v2385 = vld [vmem:[#allocation4 + $0x70] sm:$0xff]
        %v2386 = vld [vmem:[#allocation4 + $0x78] sm:$0xff]
        %2387 = vmatprep.subr.mxu0 0.0
        %2388 = vmatpush1.msra.mxu0 %v2371
        %2389 = vmatprep.subr.mxu0 0.0
        %2390 = vmatpush1.msra.mxu0 %v2372
        %2391 = vmatprep.subr.mxu0 0.0
        %2392 = vmatpush1.msra.mxu0 %v2373
        %2393 = vmatprep.subr.mxu0 0.0
        %2394 = vmatpush1.msra.mxu0 %v2374
        %2395 = vmatprep.subr.mxu0 0.0
        %2396 = vmatpush1.msra.mxu0 %v2375
        %2397 = vmatprep.subr.mxu0 0.0
        %2398 = vmatpush1.msra.mxu0 %v2376
        %2399 = vmatprep.subr.mxu0 0.0
        %2400 = vmatpush1.msra.mxu0 %v2377
        %2401 = vmatprep.subr.mxu0 0.0
        %2402 = vmatpush1.msra.mxu0 %v2378
        %2403 = vmatprep.subr.mxu0 0.0
        %2404 = vmatpush1.msra.mxu0 %v2379
        %2405 = vmatprep.subr.mxu0 0.0
        %2406 = vmatpush1.msra.mxu0 %v2380
        %2407 = vmatprep.subr.mxu0 0.0
        %2408 = vmatpush1.msra.mxu0 %v2381
        %2409 = vmatprep.subr.mxu0 0.0
        %2410 = vmatpush1.msra.mxu0 %v2382
        %2411 = vmatprep.subr.mxu0 0.0
        %2412 = vmatpush1.msra.mxu0 %v2383
        %2413 = vmatprep.subr.mxu0 0.0
        %2414 = vmatpush1.msra.mxu0 %v2384
        %2415 = vmatprep.subr.mxu0 0.0
        %2416 = vmatpush1.msra.mxu0 %v2385
        %2417 = vmatprep.subr.mxu0 0.0
        %2418 = vmatpush1.msra.mxu0 %v2386
        %2419 = vmatprep.subr.mxu0 0.0
        %2420 = vmatpush1.msra.mxu0 0.0
        %2421 = vmatprep.subr.mxu0 0.0
        %2422 = vmatpush1.msra.mxu0 0.0
        %2423 = vmatprep.subr.mxu0 0.0
        %2424 = vmatpush1.msra.mxu0 0.0
        %2425 = vmatprep.subr.mxu0 0.0
        %2426 = vmatpush1.msra.mxu0 0.0
        %2427 = vmatprep.subr.mxu0 0.0
        %2428 = vmatpush1.msra.mxu0 0.0
        %2429 = vmatprep.subr.mxu0 0.0
        %2430 = vmatpush1.msra.mxu0 0.0
        %2431 = vmatprep.subr.mxu0 0.0
        %2432 = vmatpush1.msra.mxu0 0.0
        %2433 = vmatprep.subr.mxu0 0.0
        %2434 = vmatpush1.msra.mxu0 0.0
        %2435 = vmatprep.subr.mxu0 0.0
        %2436 = vmatpush1.msra.mxu0 0.0
        %2437 = vmatprep.subr.mxu0 0.0
        %2438 = vmatpush1.msra.mxu0 0.0
        %2439 = vmatprep.subr.mxu0 0.0
        %2440 = vmatpush1.msra.mxu0 0.0
        %2441 = vmatprep.subr.mxu0 0.0
        %2442 = vmatpush1.msra.mxu0 0.0
        %2443 = vmatprep.subr.mxu0 0.0
        %2444 = vmatpush1.msra.mxu0 0.0
        %2445 = vmatprep.subr.mxu0 0.0
        %2446 = vmatpush1.msra.mxu0 0.0
        %2447 = vmatprep.subr.mxu0 0.0
        %2448 = vmatpush1.msra.mxu0 0.0
        %2449 = vmatprep.subr.mxu0 0.0
        %2450 = vmatpush1.msra.mxu0 0.0
        %2451 = vmatprep.mubr.f32.mxu0 0.0
        %2452 = vmatmul.mubr.f32.gmra.mrb[0].mxu0 %v2370
        %v2453 = vpop.f32.mrb[0].mxu0
        %v2454 = vadd.f32 0.0, %v2453
        %v2455 = vpop.f32.mrb[0].mxu0
        %2456 = vdwg.mxu0
        %v2457 = vrcp.pop 2048.0
        %v2458 = vmul.f32 %v2454, %v2457
        %v2459 = vlaneseq
        %v2460 = vshrl.u32 %v2459, 7
        %v2461 = vsub.s32 0, %v2460
        %v2462 = vrot.slane %v2458, %v2461
        %v2463 = vsub.f32 %v2302, %v2462
        %v2464 = vsub.f32 %v2303, %v2462
        %v2465 = vsub.f32 %v2304, %v2462
        %v2466 = vsub.f32 %v2305, %v2462
        %v2467 = vsub.f32 %v2306, %v2462
        %v2468 = vsub.f32 %v2307, %v2462
        %v2469 = vsub.f32 %v2308, %v2462
        %v2470 = vsub.f32 %v2309, %v2462
        %v2471 = vsub.f32 %v2310, %v2462
        %v2472 = vsub.f32 %v2311, %v2462
        %v2473 = vsub.f32 %v2312, %v2462
        %v2474 = vsub.f32 %v2313, %v2462
        %v2475 = vsub.f32 %v2314, %v2462
        %v2476 = vsub.f32 %v2315, %v2462
        %v2477 = vsub.f32 %v2316, %v2462
        %v2478 = vsub.f32 %v2317, %v2462
        %v2479 = vsub.f32 %v2318, %v2462
        %v2480 = vsub.f32 %v2319, %v2462
        %v2481 = vsub.f32 %v2320, %v2462
        %v2482 = vsub.f32 %v2321, %v2462
        %v2483 = vsub.f32 %v2322, %v2462
        %v2484 = vsub.f32 %v2323, %v2462
        %v2485 = vsub.f32 %v2324, %v2462
        %v2486 = vsub.f32 %v2325, %v2462
        %v2487 = vsub.f32 %v2326, %v2462
        %v2488 = vsub.f32 %v2327, %v2462
        %v2489 = vsub.f32 %v2328, %v2462
        %v2490 = vsub.f32 %v2329, %v2462
        %v2491 = vsub.f32 %v2330, %v2462
        %v2492 = vsub.f32 %v2331, %v2462
        %v2493 = vsub.f32 %v2332, %v2462
        %v2494 = vsub.f32 %v2333, %v2462
        %v2495 = vmul.f32 %v2463, %v2463
        %v2496 = vmul.f32 %v2464, %v2464
        %v2497 = vmul.f32 %v2465, %v2465
        %v2498 = vmul.f32 %v2466, %v2466
        %v2499 = vmul.f32 %v2467, %v2467
        %v2500 = vmul.f32 %v2468, %v2468
        %v2501 = vmul.f32 %v2469, %v2469
        %v2502 = vmul.f32 %v2470, %v2470
        %v2503 = vmul.f32 %v2471, %v2471
        %v2504 = vmul.f32 %v2472, %v2472
        %v2505 = vmul.f32 %v2473, %v2473
        %v2506 = vmul.f32 %v2474, %v2474
        %v2507 = vmul.f32 %v2475, %v2475
        %v2508 = vmul.f32 %v2476, %v2476
        %v2509 = vmul.f32 %v2477, %v2477
        %v2510 = vmul.f32 %v2478, %v2478
        %v2511 = vmul.f32 %v2479, %v2479
        %v2512 = vmul.f32 %v2480, %v2480
        %v2513 = vmul.f32 %v2481, %v2481
        %v2514 = vmul.f32 %v2482, %v2482
        %v2515 = vmul.f32 %v2483, %v2483
        %v2516 = vmul.f32 %v2484, %v2484
        %v2517 = vmul.f32 %v2485, %v2485
        %v2518 = vmul.f32 %v2486, %v2486
        %v2519 = vmul.f32 %v2487, %v2487
        %v2520 = vmul.f32 %v2488, %v2488
        %v2521 = vmul.f32 %v2489, %v2489
        %v2522 = vmul.f32 %v2490, %v2490
        %v2523 = vmul.f32 %v2491, %v2491
        %v2524 = vmul.f32 %v2492, %v2492
        %v2525 = vmul.f32 %v2493, %v2493
        %v2526 = vmul.f32 %v2494, %v2494
        %v2527 = vadd.f32 %v2495, %v2496
        %v2528 = vadd.f32 %v2527, %v2497
        %v2529 = vadd.f32 %v2528, %v2498
        %v2530 = vadd.f32 %v2529, %v2499
        %v2531 = vadd.f32 %v2530, %v2500
        %v2532 = vadd.f32 %v2531, %v2501
        %v2533 = vadd.f32 %v2532, %v2502
        %v2534 = vadd.f32 %v2533, %v2503
        %v2535 = vadd.f32 %v2534, %v2504
        %v2536 = vadd.f32 %v2535, %v2505
        %v2537 = vadd.f32 %v2536, %v2506
        %v2538 = vadd.f32 %v2537, %v2507
        %v2539 = vadd.f32 %v2538, %v2508
        %v2540 = vadd.f32 %v2539, %v2509
        %v2541 = vadd.f32 %v2540, %v2510
        %v2542 = vadd.f32 %v2541, %v2511
        %v2543 = vadd.f32 %v2542, %v2512
        %v2544 = vadd.f32 %v2543, %v2513
        %v2545 = vadd.f32 %v2544, %v2514
        %v2546 = vadd.f32 %v2545, %v2515
        %v2547 = vadd.f32 %v2546, %v2516
        %v2548 = vadd.f32 %v2547, %v2517
        %v2549 = vadd.f32 %v2548, %v2518
        %v2550 = vadd.f32 %v2549, %v2519
        %v2551 = vadd.f32 %v2550, %v2520
        %v2552 = vadd.f32 %v2551, %v2521
        %v2553 = vadd.f32 %v2552, %v2522
        %v2554 = vadd.f32 %v2553, %v2523
        %v2555 = vadd.f32 %v2554, %v2524
        %v2556 = vadd.f32 %v2555, %v2525
        %v2557 = vadd.f32 %v2556, %v2526
        %v2558 = vrot.slane %v2557, 4
        %v2559 = vadd.f32 %v2557, %v2558
        %v2560 = vrot.slane %v2559, 2
        %v2561 = vadd.f32 %v2559, %v2560
        %v2562 = vrot.slane %v2561, 1
        %v2563 = vadd.f32 %v2561, %v2562
        %2564 = vmatprep.subr.mxu0 0.0
        %2565 = vmatpush1.msra.mxu0 %v2371
        %2566 = vmatprep.subr.mxu0 0.0
        %2567 = vmatpush1.msra.mxu0 %v2372
        %2568 = vmatprep.subr.mxu0 0.0
        %2569 = vmatpush1.msra.mxu0 %v2373
        %2570 = vmatprep.subr.mxu0 0.0
        %2571 = vmatpush1.msra.mxu0 %v2374
        %2572 = vmatprep.subr.mxu0 0.0
        %2573 = vmatpush1.msra.mxu0 %v2375
        %2574 = vmatprep.subr.mxu0 0.0
        %2575 = vmatpush1.msra.mxu0 %v2376
        %2576 = vmatprep.subr.mxu0 0.0
        %2577 = vmatpush1.msra.mxu0 %v2377
        %2578 = vmatprep.subr.mxu0 0.0
        %2579 = vmatpush1.msra.mxu0 %v2378
        %2580 = vmatprep.subr.mxu0 0.0
        %2581 = vmatpush1.msra.mxu0 %v2379
        %2582 = vmatprep.subr.mxu0 0.0
        %2583 = vmatpush1.msra.mxu0 %v2380
        %2584 = vmatprep.subr.mxu0 0.0
        %2585 = vmatpush1.msra.mxu0 %v2381
        %2586 = vmatprep.subr.mxu0 0.0
        %2587 = vmatpush1.msra.mxu0 %v2382
        %2588 = vmatprep.subr.mxu0 0.0
        %2589 = vmatpush1.msra.mxu0 %v2383
        %2590 = vmatprep.subr.mxu0 0.0
        %2591 = vmatpush1.msra.mxu0 %v2384
        %2592 = vmatprep.subr.mxu0 0.0
        %2593 = vmatpush1.msra.mxu0 %v2385
        %2594 = vmatprep.subr.mxu0 0.0
        %2595 = vmatpush1.msra.mxu0 %v2386
        %2596 = vmatprep.subr.mxu0 0.0
        %2597 = vmatpush1.msra.mxu0 0.0
        %2598 = vmatprep.subr.mxu0 0.0
        %2599 = vmatpush1.msra.mxu0 0.0
        %2600 = vmatprep.subr.mxu0 0.0
        %2601 = vmatpush1.msra.mxu0 0.0
        %2602 = vmatprep.subr.mxu0 0.0
        %2603 = vmatpush1.msra.mxu0 0.0
        %2604 = vmatprep.subr.mxu0 0.0
        %2605 = vmatpush1.msra.mxu0 0.0
        %2606 = vmatprep.subr.mxu0 0.0
        %2607 = vmatpush1.msra.mxu0 0.0
        %2608 = vmatprep.subr.mxu0 0.0
        %2609 = vmatpush1.msra.mxu0 0.0
        %2610 = vmatprep.subr.mxu0 0.0
        %2611 = vmatpush1.msra.mxu0 0.0
        %2612 = vmatprep.subr.mxu0 0.0
        %2613 = vmatpush1.msra.mxu0 0.0
        %2614 = vmatprep.subr.mxu0 0.0
        %2615 = vmatpush1.msra.mxu0 0.0
        %2616 = vmatprep.subr.mxu0 0.0
        %2617 = vmatpush1.msra.mxu0 0.0
        %2618 = vmatprep.subr.mxu0 0.0
        %2619 = vmatpush1.msra.mxu0 0.0
        %2620 = vmatprep.subr.mxu0 0.0
        %2621 = vmatpush1.msra.mxu0 0.0
        %2622 = vmatprep.subr.mxu0 0.0
        %2623 = vmatpush1.msra.mxu0 0.0
        %2624 = vmatprep.subr.mxu0 0.0
        %2625 = vmatpush1.msra.mxu0 0.0
        %2626 = vmatprep.subr.mxu0 0.0
        %2627 = vmatpush1.msra.mxu0 0.0
        %2628 = vmatprep.mubr.f32.mxu0 0.0
        %2629 = vmatmul.mubr.f32.gmra.mrb[0].mxu0 %v2563
        %v2630 = vpop.f32.mrb[0].mxu0
        %v2631 = vadd.f32 0.0, %v2630
        %v2632 = vpop.f32.mrb[0].mxu0
        %2633 = vdwg.mxu0
        %v2634 = vmul.f32 %v2631, %v2457
        %v2635 = vadd.f32 %v2634, 1e-05
        %v2636 = vrsqrt.pop %v2635
        %v2637 = vlaneseq
        %v2638 = vshrl.u32 %v2637, 7
        %v2639 = vsub.s32 0, %v2638
        %v2640 = vrot.slane %v2636, %v2639
        %v2641 = vmul.f32 %v2463, %v2640
        %v2642 = vmul.f32 %v2464, %v2640
        %v2643 = vmul.f32 %v2465, %v2640
        %v2644 = vmul.f32 %v2466, %v2640
        %v2645 = vmul.f32 %v2467, %v2640
        %v2646 = vmul.f32 %v2468, %v2640
        %v2647 = vmul.f32 %v2469, %v2640
        %v2648 = vmul.f32 %v2470, %v2640
        %v2649 = vmul.f32 %v2471, %v2640
        %v2650 = vmul.f32 %v2472, %v2640
        %v2651 = vmul.f32 %v2473, %v2640
        %v2652 = vmul.f32 %v2474, %v2640
        %v2653 = vmul.f32 %v2475, %v2640
        %v2654 = vmul.f32 %v2476, %v2640
        %v2655 = vmul.f32 %v2477, %v2640
        %v2656 = vmul.f32 %v2478, %v2640
        %v2657 = vmul.f32 %v2479, %v2640
        %v2658 = vmul.f32 %v2480, %v2640
        %v2659 = vmul.f32 %v2481, %v2640
        %v2660 = vmul.f32 %v2482, %v2640
        %v2661 = vmul.f32 %v2483, %v2640
        %v2662 = vmul.f32 %v2484, %v2640
        %v2663 = vmul.f32 %v2485, %v2640
        %v2664 = vmul.f32 %v2486, %v2640
        %v2665 = vmul.f32 %v2487, %v2640
        %v2666 = vmul.f32 %v2488, %v2640
        %v2667 = vmul.f32 %v2489, %v2640
        %v2668 = vmul.f32 %v2490, %v2640
        %v2669 = vmul.f32 %v2491, %v2640
        %v2670 = vmul.f32 %v2492, %v2640
        %v2671 = vmul.f32 %v2493, %v2640
        %v2672 = vmul.f32 %v2494, %v2640
        %v2674 = vlaneseq
        %v2675 = vshrl.u32 %v2674, 7
        %v2676 = vsub.s32 0, %v2675
        %v2677 = vrot.slane %v406, %v2676
        %v2679 = vmul.f32 %v2641, %v2677
        %v2680 = vmul.f32 %v2642, %v2677
        %v2681 = vmul.f32 %v2643, %v2677
        %v2682 = vmul.f32 %v2644, %v2677
        %v2683 = vmul.f32 %v2645, %v2677
        %v2684 = vmul.f32 %v2646, %v2677
        %v2685 = vmul.f32 %v2647, %v2677
        %v2686 = vmul.f32 %v2648, %v2677
        %v2687 = vmul.f32 %v2649, %v2677
        %v2688 = vmul.f32 %v2650, %v2677
        %v2689 = vmul.f32 %v2651, %v2677
        %v2690 = vmul.f32 %v2652, %v2677
        %v2691 = vmul.f32 %v2653, %v2677
        %v2692 = vmul.f32 %v2654, %v2677
        %v2693 = vmul.f32 %v2655, %v2677
        %v2694 = vmul.f32 %v2656, %v2677
        %v2695 = vmul.f32 %v2657, %v2677
        %v2696 = vmul.f32 %v2658, %v2677
        %v2697 = vmul.f32 %v2659, %v2677
        %v2698 = vmul.f32 %v2660, %v2677
        %v2699 = vmul.f32 %v2661, %v2677
        %v2700 = vmul.f32 %v2662, %v2677
        %v2701 = vmul.f32 %v2663, %v2677
        %v2702 = vmul.f32 %v2664, %v2677
        %v2703 = vmul.f32 %v2665, %v2677
        %v2704 = vmul.f32 %v2666, %v2677
        %v2705 = vmul.f32 %v2667, %v2677
        %v2706 = vmul.f32 %v2668, %v2677
        %v2707 = vmul.f32 %v2669, %v2677
        %v2708 = vmul.f32 %v2670, %v2677
        %v2709 = vmul.f32 %v2671, %v2677
        %v2710 = vmul.f32 %v2672, %v2677
        %v2712 = vlaneseq
        %v2713 = vshrl.u32 %v2712, 7
        %v2714 = vsub.s32 0, %v2713
        %v2715 = vrot.slane %v407, %v2714
        %v2717 = vadd.f32 %v2679, %v2715
        %v2718 = vadd.f32 %v2680, %v2715
        %v2719 = vadd.f32 %v2681, %v2715
        %v2720 = vadd.f32 %v2682, %v2715
        %v2721 = vadd.f32 %v2683, %v2715
        %v2722 = vadd.f32 %v2684, %v2715
        %v2723 = vadd.f32 %v2685, %v2715
        %v2724 = vadd.f32 %v2686, %v2715
        %v2725 = vadd.f32 %v2687, %v2715
        %v2726 = vadd.f32 %v2688, %v2715
        %v2727 = vadd.f32 %v2689, %v2715
        %v2728 = vadd.f32 %v2690, %v2715
        %v2729 = vadd.f32 %v2691, %v2715
        %v2730 = vadd.f32 %v2692, %v2715
        %v2731 = vadd.f32 %v2693, %v2715
        %v2732 = vadd.f32 %v2694, %v2715
        %v2733 = vadd.f32 %v2695, %v2715
        %v2734 = vadd.f32 %v2696, %v2715
        %v2735 = vadd.f32 %v2697, %v2715
        %v2736 = vadd.f32 %v2698, %v2715
        %v2737 = vadd.f32 %v2699, %v2715
        %v2738 = vadd.f32 %v2700, %v2715
        %v2739 = vadd.f32 %v2701, %v2715
        %v2740 = vadd.f32 %v2702, %v2715
        %v2741 = vadd.f32 %v2703, %v2715
        %v2742 = vadd.f32 %v2704, %v2715
        %v2743 = vadd.f32 %v2705, %v2715
        %v2744 = vadd.f32 %v2706, %v2715
        %v2745 = vadd.f32 %v2707, %v2715
        %v2746 = vadd.f32 %v2708, %v2715
        %v2747 = vadd.f32 %v2709, %v2715
        %v2748 = vadd.f32 %v2710, %v2715
        %v2749 = vtanh.pop %v2717
        %v2750 = vtanh.pop %v2718
        %v2751 = vtanh.pop %v2719
        %v2752 = vtanh.pop %v2720
        %v2753 = vtanh.pop %v2721
        %v2754 = vtanh.pop %v2722
        %v2755 = vtanh.pop %v2723
        %v2756 = vtanh.pop %v2724
        %v2757 = vtanh.pop %v2725
        %v2758 = vtanh.pop %v2726
        %v2759 = vtanh.pop %v2727
        %v2760 = vtanh.pop %v2728
        %v2761 = vtanh.pop %v2729
        %v2762 = vtanh.pop %v2730
        %v2763 = vtanh.pop %v2731
        %v2764 = vtanh.pop %v2732
        %v2765 = vtanh.pop %v2733
        %v2766 = vtanh.pop %v2734
        %v2767 = vtanh.pop %v2735
        %v2768 = vtanh.pop %v2736
        %v2769 = vtanh.pop %v2737
        %v2770 = vtanh.pop %v2738
        %v2771 = vtanh.pop %v2739
        %v2772 = vtanh.pop %v2740
        %v2773 = vtanh.pop %v2741
        %v2774 = vtanh.pop %v2742
        %v2775 = vtanh.pop %v2743
        %v2776 = vtanh.pop %v2744
        %v2777 = vtanh.pop %v2745
        %v2778 = vtanh.pop %v2746
        %v2779 = vtanh.pop %v2747
        %v2780 = vtanh.pop %v2748
        %v2782 = vlaneseq
        %v2783 = vshrl.u32 %v2782, 7
        %v2784 = vsub.s32 0, %v2783
        %v2785 = vrot.slane %v408, %v2784
        %v2787 = vsub.f32 %v2749, %v2785
        %v2788 = vsub.f32 %v2750, %v2785
        %v2789 = vsub.f32 %v2751, %v2785
        %v2790 = vsub.f32 %v2752, %v2785
        %v2791 = vsub.f32 %v2753, %v2785
        %v2792 = vsub.f32 %v2754, %v2785
        %v2793 = vsub.f32 %v2755, %v2785
        %v2794 = vsub.f32 %v2756, %v2785
        %v2795 = vsub.f32 %v2757, %v2785
        %v2796 = vsub.f32 %v2758, %v2785
        %v2797 = vsub.f32 %v2759, %v2785
        %v2798 = vsub.f32 %v2760, %v2785
        %v2799 = vsub.f32 %v2761, %v2785
        %v2800 = vsub.f32 %v2762, %v2785
        %v2801 = vsub.f32 %v2763, %v2785
        %v2802 = vsub.f32 %v2764, %v2785
        %v2803 = vsub.f32 %v2765, %v2785
        %v2804 = vsub.f32 %v2766, %v2785
        %v2805 = vsub.f32 %v2767, %v2785
        %v2806 = vsub.f32 %v2768, %v2785
        %v2807 = vsub.f32 %v2769, %v2785
        %v2808 = vsub.f32 %v2770, %v2785
        %v2809 = vsub.f32 %v2771, %v2785
        %v2810 = vsub.f32 %v2772, %v2785
        %v2811 = vsub.f32 %v2773, %v2785
        %v2812 = vsub.f32 %v2774, %v2785
        %v2813 = vsub.f32 %v2775, %v2785
        %v2814 = vsub.f32 %v2776, %v2785
        %v2815 = vsub.f32 %v2777, %v2785
        %v2816 = vsub.f32 %v2778, %v2785
        %v2817 = vsub.f32 %v2779, %v2785
        %v2818 = vsub.f32 %v2780, %v2785
        %2851 = vrot.lane.b32.xlu0 %v2787, 32
        %v2852 = vpop.permute.xlu0 %2851
        %2853 = vrot.lane.b32.xlu0 %v2788, 32
        %v2854 = vpop.permute.xlu0 %2853
        %2855 = vrot.lane.b32.xlu0 %v2789, 32
        %v2856 = vpop.permute.xlu0 %2855
        %2857 = vrot.lane.b32.xlu0 %v2790, 32
        %v2858 = vpop.permute.xlu0 %2857
        %2859 = vrot.lane.b32.xlu0 %v2791, 32
        %v2860 = vpop.permute.xlu0 %2859
        %2861 = vrot.lane.b32.xlu0 %v2792, 32
        %v2862 = vpop.permute.xlu0 %2861
        %2863 = vrot.lane.b32.xlu0 %v2793, 32
        %v2864 = vpop.permute.xlu0 %2863
        %2865 = vrot.lane.b32.xlu0 %v2794, 32
        %v2866 = vpop.permute.xlu0 %2865
        %2867 = vrot.lane.b32.xlu0 %v2795, 32
        %v2868 = vpop.permute.xlu0 %2867
        %2869 = vrot.lane.b32.xlu0 %v2796, 32
        %v2870 = vpop.permute.xlu0 %2869
        %2871 = vrot.lane.b32.xlu0 %v2797, 32
        %v2872 = vpop.permute.xlu0 %2871
        %2873 = vrot.lane.b32.xlu0 %v2798, 32
        %v2874 = vpop.permute.xlu0 %2873
        %2875 = vrot.lane.b32.xlu0 %v2799, 32
        %v2876 = vpop.permute.xlu0 %2875
        %2877 = vrot.lane.b32.xlu0 %v2800, 32
        %v2878 = vpop.permute.xlu0 %2877
        %2879 = vrot.lane.b32.xlu0 %v2801, 32
        %v2880 = vpop.permute.xlu0 %2879
        %2881 = vrot.lane.b32.xlu0 %v2802, 32
        %v2882 = vpop.permute.xlu0 %2881
        %2883 = vrot.lane.b32.xlu0 %v2803, 32
        %v2884 = vpop.permute.xlu0 %2883
        %2885 = vrot.lane.b32.xlu0 %v2804, 32
        %v2886 = vpop.permute.xlu0 %2885
        %2887 = vrot.lane.b32.xlu0 %v2805, 32
        %v2888 = vpop.permute.xlu0 %2887
        %2889 = vrot.lane.b32.xlu0 %v2806, 32
        %v2890 = vpop.permute.xlu0 %2889
        %2891 = vrot.lane.b32.xlu0 %v2807, 32
        %v2892 = vpop.permute.xlu0 %2891
        %2893 = vrot.lane.b32.xlu0 %v2808, 32
        %v2894 = vpop.permute.xlu0 %2893
        %2895 = vrot.lane.b32.xlu0 %v2809, 32
        %v2896 = vpop.permute.xlu0 %2895
        %2897 = vrot.lane.b32.xlu0 %v2810, 32
        %v2898 = vpop.permute.xlu0 %2897
        %2899 = vrot.lane.b32.xlu0 %v2811, 32
        %v2900 = vpop.permute.xlu0 %2899
        %2901 = vrot.lane.b32.xlu0 %v2812, 32
        %v2902 = vpop.permute.xlu0 %2901
        %2903 = vrot.lane.b32.xlu0 %v2813, 32
        %v2904 = vpop.permute.xlu0 %2903
        %2905 = vrot.lane.b32.xlu0 %v2814, 32
        %v2906 = vpop.permute.xlu0 %2905
        %2907 = vrot.lane.b32.xlu0 %v2815, 32
        %v2908 = vpop.permute.xlu0 %2907
        %2909 = vrot.lane.b32.xlu0 %v2816, 32
        %v2910 = vpop.permute.xlu0 %2909
        %2911 = vrot.lane.b32.xlu0 %v2817, 32
        %v2912 = vpop.permute.xlu0 %2911
        %2913 = vrot.lane.b32.xlu0 %v2818, 32
        %v2914 = vpop.permute.xlu0 %2913
        %v2947 = vmul.f32 %v847, %v2852
        %v2948 = vmul.f32 %v849, %v2854
        %v2949 = vmul.f32 %v851, %v2856
        %v2950 = vmul.f32 %v853, %v2858
        %v2951 = vmul.f32 %v855, %v2860
        %v2952 = vmul.f32 %v857, %v2862
        %v2953 = vmul.f32 %v859, %v2864
        %v2954 = vmul.f32 %v861, %v2866
        %v2955 = vmul.f32 %v863, %v2868
        %v2956 = vmul.f32 %v865, %v2870
        %v2957 = vmul.f32 %v867, %v2872
        %v2958 = vmul.f32 %v869, %v2874
        %v2959 = vmul.f32 %v871, %v2876
        %v2960 = vmul.f32 %v873, %v2878
        %v2961 = vmul.f32 %v875, %v2880
        %v2962 = vmul.f32 %v877, %v2882
        %v2963 = vmul.f32 %v879, %v2884
        %v2964 = vmul.f32 %v881, %v2886
        %v2965 = vmul.f32 %v883, %v2888
        %v2966 = vmul.f32 %v885, %v2890
        %v2967 = vmul.f32 %v887, %v2892
        %v2968 = vmul.f32 %v889, %v2894
        %v2969 = vmul.f32 %v891, %v2896
        %v2970 = vmul.f32 %v893, %v2898
        %v2971 = vmul.f32 %v895, %v2900
        %v2972 = vmul.f32 %v897, %v2902
        %v2973 = vmul.f32 %v899, %v2904
        %v2974 = vmul.f32 %v901, %v2906
        %v2975 = vmul.f32 %v903, %v2908
        %v2976 = vmul.f32 %v905, %v2910
        %v2977 = vmul.f32 %v907, %v2912
        %v2978 = vmul.f32 %v909, %v2914
        %3011 = vrot.lane.b32.xlu0 %v2947, 96
        %v3012 = vpop.permute.xlu0 %3011
        %3013 = vrot.lane.b32.xlu0 %v2948, 96
        %v3014 = vpop.permute.xlu0 %3013
        %3015 = vrot.lane.b32.xlu0 %v2949, 96
        %v3016 = vpop.permute.xlu0 %3015
        %3017 = vrot.lane.b32.xlu0 %v2950, 96
        %v3018 = vpop.permute.xlu0 %3017
        %3019 = vrot.lane.b32.xlu0 %v2951, 96
        %v3020 = vpop.permute.xlu0 %3019
        %3021 = vrot.lane.b32.xlu0 %v2952, 96
        %v3022 = vpop.permute.xlu0 %3021
        %3023 = vrot.lane.b32.xlu0 %v2953, 96
        %v3024 = vpop.permute.xlu0 %3023
        %3025 = vrot.lane.b32.xlu0 %v2954, 96
        %v3026 = vpop.permute.xlu0 %3025
        %3027 = vrot.lane.b32.xlu0 %v2955, 96
        %v3028 = vpop.permute.xlu0 %3027
        %3029 = vrot.lane.b32.xlu0 %v2956, 96
        %v3030 = vpop.permute.xlu0 %3029
        %3031 = vrot.lane.b32.xlu0 %v2957, 96
        %v3032 = vpop.permute.xlu0 %3031
        %3033 = vrot.lane.b32.xlu0 %v2958, 96
        %v3034 = vpop.permute.xlu0 %3033
        %3035 = vrot.lane.b32.xlu0 %v2959, 96
        %v3036 = vpop.permute.xlu0 %3035
        %3037 = vrot.lane.b32.xlu0 %v2960, 96
        %v3038 = vpop.permute.xlu0 %3037
        %3039 = vrot.lane.b32.xlu0 %v2961, 96
        %v3040 = vpop.permute.xlu0 %3039
        %3041 = vrot.lane.b32.xlu0 %v2962, 96
        %v3042 = vpop.permute.xlu0 %3041
        %3043 = vrot.lane.b32.xlu0 %v2963, 96
        %v3044 = vpop.permute.xlu0 %3043
        %3045 = vrot.lane.b32.xlu0 %v2964, 96
        %v3046 = vpop.permute.xlu0 %3045
        %3047 = vrot.lane.b32.xlu0 %v2965, 96
        %v3048 = vpop.permute.xlu0 %3047
        %3049 = vrot.lane.b32.xlu0 %v2966, 96
        %v3050 = vpop.permute.xlu0 %3049
        %3051 = vrot.lane.b32.xlu0 %v2967, 96
        %v3052 = vpop.permute.xlu0 %3051
        %3053 = vrot.lane.b32.xlu0 %v2968, 96
        %v3054 = vpop.permute.xlu0 %3053
        %3055 = vrot.lane.b32.xlu0 %v2969, 96
        %v3056 = vpop.permute.xlu0 %3055
        %3057 = vrot.lane.b32.xlu0 %v2970, 96
        %v3058 = vpop.permute.xlu0 %3057
        %3059 = vrot.lane.b32.xlu0 %v2971, 96
        %v3060 = vpop.permute.xlu0 %3059
        %3061 = vrot.lane.b32.xlu0 %v2972, 96
        %v3062 = vpop.permute.xlu0 %3061
        %3063 = vrot.lane.b32.xlu0 %v2973, 96
        %v3064 = vpop.permute.xlu0 %3063
        %3065 = vrot.lane.b32.xlu0 %v2974, 96
        %v3066 = vpop.permute.xlu0 %3065
        %3067 = vrot.lane.b32.xlu0 %v2975, 96
        %v3068 = vpop.permute.xlu0 %3067
        %3069 = vrot.lane.b32.xlu0 %v2976, 96
        %v3070 = vpop.permute.xlu0 %3069
        %3071 = vrot.lane.b32.xlu0 %v2977, 96
        %v3072 = vpop.permute.xlu0 %3071
        %3073 = vrot.lane.b32.xlu0 %v2978, 96
        %v3074 = vpop.permute.xlu0 %3073
        %v3107 = vadd.f32 %v2785, %v3012
        %v3108 = vadd.f32 %v2785, %v3014
        %v3109 = vadd.f32 %v2785, %v3016
        %v3110 = vadd.f32 %v2785, %v3018
        %v3111 = vadd.f32 %v2785, %v3020
        %v3112 = vadd.f32 %v2785, %v3022
        %v3113 = vadd.f32 %v2785, %v3024
        %v3114 = vadd.f32 %v2785, %v3026
        %v3115 = vadd.f32 %v2785, %v3028
        %v3116 = vadd.f32 %v2785, %v3030
        %v3117 = vadd.f32 %v2785, %v3032
        %v3118 = vadd.f32 %v2785, %v3034
        %v3119 = vadd.f32 %v2785, %v3036
        %v3120 = vadd.f32 %v2785, %v3038
        %v3121 = vadd.f32 %v2785, %v3040
        %v3122 = vadd.f32 %v2785, %v3042
        %v3123 = vadd.f32 %v2785, %v3044
        %v3124 = vadd.f32 %v2785, %v3046
        %v3125 = vadd.f32 %v2785, %v3048
        %v3126 = vadd.f32 %v2785, %v3050
        %v3127 = vadd.f32 %v2785, %v3052
        %v3128 = vadd.f32 %v2785, %v3054
        %v3129 = vadd.f32 %v2785, %v3056
        %v3130 = vadd.f32 %v2785, %v3058
        %v3131 = vadd.f32 %v2785, %v3060
        %v3132 = vadd.f32 %v2785, %v3062
        %v3133 = vadd.f32 %v2785, %v3064
        %v3134 = vadd.f32 %v2785, %v3066
        %v3135 = vadd.f32 %v2785, %v3068
        %v3136 = vadd.f32 %v2785, %v3070
        %v3137 = vadd.f32 %v2785, %v3072
        %v3138 = vadd.f32 %v2785, %v3074
        %3139 = vst.msk [vmem:[%s335] sm:$0xff] %vm1507, %v3107
        %3140 = vst.msk [vmem:[%s335 + $0x8] sm:$0xff] %vm1507, %v3108
        %3141 = vst.msk [vmem:[%s335 + $0x10] sm:$0xff] %vm1507, %v3109
        %3142 = vst.msk [vmem:[%s335 + $0x18] sm:$0xff] %vm1507, %v3110
        %3143 = vst.msk [vmem:[%s335 + $0x20] sm:$0xff] %vm1507, %v3111
        %3144 = vst.msk [vmem:[%s335 + $0x28] sm:$0xff] %vm1507, %v3112
        %3145 = vst.msk [vmem:[%s335 + $0x30] sm:$0xff] %vm1507, %v3113
        %3146 = vst.msk [vmem:[%s335 + $0x38] sm:$0xff] %vm1507, %v3114
        %3147 = vst.msk [vmem:[%s335 + $0x40] sm:$0xff] %vm1507, %v3115
        %3148 = vst.msk [vmem:[%s335 + $0x48] sm:$0xff] %vm1507, %v3116
        %3149 = vst.msk [vmem:[%s335 + $0x50] sm:$0xff] %vm1507, %v3117
        %3150 = vst.msk [vmem:[%s335 + $0x58] sm:$0xff] %vm1507, %v3118
        %3151 = vst.msk [vmem:[%s335 + $0x60] sm:$0xff] %vm1507, %v3119
        %3152 = vst.msk [vmem:[%s335 + $0x68] sm:$0xff] %vm1507, %v3120
        %3153 = vst.msk [vmem:[%s335 + $0x70] sm:$0xff] %vm1507, %v3121
        %3154 = vst.msk [vmem:[%s335 + $0x78] sm:$0xff] %vm1507, %v3122
        %3155 = vst.msk [vmem:[%s335 + $0x80] sm:$0xff] %vm1507, %v3123
        %3156 = vst.msk [vmem:[%s335 + $0x88] sm:$0xff] %vm1507, %v3124
        %3157 = vst.msk [vmem:[%s335 + $0x90] sm:$0xff] %vm1507, %v3125
        %3158 = vst.msk [vmem:[%s335 + $0x98] sm:$0xff] %vm1507, %v3126
        %3159 = vst.msk [vmem:[%s335 + $0xa0] sm:$0xff] %vm1507, %v3127
        %3160 = vst.msk [vmem:[%s335 + $0xa8] sm:$0xff] %vm1507, %v3128
        %3161 = vst.msk [vmem:[%s335 + $0xb0] sm:$0xff] %vm1507, %v3129
        %3162 = vst.msk [vmem:[%s335 + $0xb8] sm:$0xff] %vm1507, %v3130
        %3163 = vst.msk [vmem:[%s335 + $0xc0] sm:$0xff] %vm1507, %v3131
        %3164 = vst.msk [vmem:[%s335 + $0xc8] sm:$0xff] %vm1507, %v3132
        %3165 = vst.msk [vmem:[%s335 + $0xd0] sm:$0xff] %vm1507, %v3133
        %3166 = vst.msk [vmem:[%s335 + $0xd8] sm:$0xff] %vm1507, %v3134
        %3167 = vst.msk [vmem:[%s335 + $0xe0] sm:$0xff] %vm1507, %v3135
        %3168 = vst.msk [vmem:[%s335 + $0xe8] sm:$0xff] %vm1507, %v3136
        %3169 = vst.msk [vmem:[%s335 + $0xf0] sm:$0xff] %vm1507, %v3137
        %3170 = vst.msk [vmem:[%s335 + $0xf8] sm:$0xff] %vm1507, %v3138
        %p3171 = scmp.lt.s32.totalorder %s21, 1
        %s3172 = scalar_select %p3171, %s21, 1
        %s3173 = smul.addr %s3172, 32
        %s3174 = smul.addr %s3173, 8
        %s3175 = scalar_lea.vmem %s8, %s3174
        // Predicated region
        $region61: #{tpu_custom_call.1} parent=51 // pred_check
          %p3176 = pneg %p212
        $region62: #{tpu_custom_call.1} parent=51 // pred_check_branch
          %3178 = sbr.rel (%p3176) target = $region64
        $region63: #{tpu_custom_call.1} parent=51 // pred_region
          _
        $region64: #{tpu_custom_call.1} parent=51 // pred_fallthru
          _
      $region52: #{tpu_custom_call.1} parent=5 // pred_fallthru
        _
      %p3179 = scmp.le.s32.totalorder 2, %s16
      // Predicated region
      $region65: #{tpu_custom_call.1} parent=5 // pred_check
        %p3180 = pneg %p3179
      $region66: #{tpu_custom_call.1} parent=5 // pred_check_branch
        %3182 = sbr.rel (%p3180) target = $region68
      $region67: #{tpu_custom_call.1} parent=5 // pred_region
        %s3183 = ssub.s32 %s16, 2
        // Predicated region
        $region69: #{tpu_custom_call.1} parent=67 // pred_check
          %p3184 = pneg %p218
        $region70: #{tpu_custom_call.1} parent=67 // pred_check_branch
          %3186 = sbr.rel (%p3184) target = $region72
        $region71: #{tpu_custom_call.1} parent=67 // pred_region
          %p3187 = scmp.lt.s32.totalorder %s22, 1
          %s3188 = scalar_select %p3187, %s22, 1
          %s3189 = smul.addr %s3188, 32
          %s3190 = smul.addr %s3189, 8
          %s3191 = scalar_lea.vmem %s8, %s3190
        $region72: #{tpu_custom_call.1} parent=67 // pred_fallthru
          _
      $region68: #{tpu_custom_call.1} parent=5 // pred_fallthru
        _
    $region6: #{tpu_custom_call.1} parent=1 // loop_footer
      %s20 = sadd.s32 1, %s16
    $region7: #{tpu_custom_call.1} parent=1 // loop_footer_branch
      %15 = sbr.rel target = $region3
    $region8: #{tpu_custom_call.1} parent=1 // loop_exit
      _
    %3192 = vsyncpa [#allocation3], 1
    %s3193 = scalar_lea.sflag [#allocation3], 1
    %3194 = vsyncpa %s3193, 1
    %3195 = vsyncpa [#allocation5], 1

</llo_original>
